<compile_context>
chip_gen: v6e
topology: v6e:2x2x1
jax: 0.10.0
libtpu: 0.0.40
codegen_flags: <defaults>
</compile_context>

<pallas_src>
import jax
import jax.numpy as jnp
from jax import lax
from jax.experimental import pallas as pl
from jax.experimental.pallas import tpu as pltpu

# ---------------------------------------------------------------------------
# Problem sizes (TPU-tile friendly)
# ---------------------------------------------------------------------------
FRAME_LEN = 128                 # samples per analysis frame (lane dim)
TILE      = 512                 # frames per grid step (sublane dim of a tile)
N_TILES   = 4                   # grid size (multiple of 2 -> 2 steps / v7x TC)
N_FRAMES  = TILE * N_TILES      # total frames (2048, same as previous version)
T_SAMPLES = FRAME_LEN * N_FRAMES
D_EMB     = 128                 # embedding dim
MAX_SPK   = 3                   # max_speakers in the reference forward
S_FULL    = 128                 # centroid rows padded to full lane width
THRESH    = 0.005               # mask_waveform threshold from the reference
PACK_ROWS = 8                   # sublane rows of the tiny packed output slab

assert MAX_SPK == 3, "in-kernel argmax below is hardcoded for 3 speakers"


# ---------------------------------------------------------------------------
# Fused kernel: detection -> masking -> embedding -> speaker argmax
# ---------------------------------------------------------------------------
def _diar_kernel(frames_ref, w_det_ref, b_det_ref, w_emb_ref, b_emb_ref,
                 cent_ref, masked_ref, packed_ref):
    frames = frames_ref[...]                                     # (TILE, F) f32
    b_det = b_det_ref[0, 0]                                      # scalar from SMEM

    # --- 1. speech detection (sublane orientation, VPU/XLU) -----------------
    h_col = jnp.sum(frames * w_det_ref[0:1, :], axis=-1, keepdims=True)  # (TILE,1)
    scores_col = jax.nn.sigmoid(h_col + b_det)                   # (TILE, 1) f32

    # --- 2. mask_waveform: keep frames with score > threshold ---------------
    mask = (scores_col > THRESH).astype(jnp.float32)             # (TILE, 1)
    masked = frames * mask                                       # (TILE, F) f32
    masked_ref[...] = masked

    # --- 3. diarization: embeddings + transposed similarity (lane-major) ----
    emb = jnp.tanh(
        jnp.dot(masked.astype(jnp.bfloat16), w_emb_ref[...],
                preferred_element_type=jnp.float32) + b_emb_ref[...])   # (TILE, D)
    # centroids (S,D) x emb (TILE,D) contracting last dims -> (S_FULL, TILE)
    logits_t = lax.dot_general(
        cent_ref[...], emb.astype(jnp.bfloat16),
        dimension_numbers=(((1,), (1,)), ((), ())),
        preferred_element_type=jnp.float32)                      # (S_FULL, TILE)

    # lane-major detection score row for the packed output (tiny MXU matmul)
    h_row = lax.dot_general(
        w_det_ref[...], frames,
        dimension_numbers=(((1,), (1,)), ((), ())),
        preferred_element_type=jnp.float32)[0:1, :]              # (1, TILE)
    scores_row = jax.nn.sigmoid(h_row + b_det)                   # (1, TILE)

    # --- in-kernel argmax over the MAX_SPK real centroids (lane-major) ------
    l0 = logits_t[0:1, :]                                        # (1, TILE)
    l1 = logits_t[1:2, :]
    l2 = logits_t[2:3, :]
    best01 = jnp.maximum(l0, l1)
    idx01 = jnp.where(l1 > l0, 1.0, 0.0)
    labels_row = jnp.where(l2 > best01, 2.0, idx01)              # (1, TILE) f32

    # --- tiny lane-dense packed slab: one full unmasked (8, TILE) store -----
    # row 0: score, row 1: label, rows 2-4: logits of the 3 speakers, 5-7: 0
    row = lax.broadcasted_iota(jnp.int32, (PACK_ROWS, TILE), 0)
    packed = jnp.zeros((PACK_ROWS, TILE), jnp.float32)
    packed = jnp.where(row == 0, jnp.broadcast_to(scores_row, (PACK_ROWS, TILE)), packed)
    packed = jnp.where(row == 1, jnp.broadcast_to(labels_row, (PACK_ROWS, TILE)), packed)
    packed = jnp.where(row == 2, jnp.broadcast_to(l0, (PACK_ROWS, TILE)), packed)
    packed = jnp.where(row == 3, jnp.broadcast_to(l1, (PACK_ROWS, TILE)), packed)
    packed = jnp.where(row == 4, jnp.broadcast_to(l2, (PACK_ROWS, TILE)), packed)
    packed_ref[...] = packed


def speaker_diarization_forward(audio, params):
    """audio: (T_SAMPLES,) f32 waveform.  Returns (scores, masked_wave, labels)."""
    frames = audio.reshape(N_FRAMES, FRAME_LEN).astype(jnp.float32)

    cost = pl.CostEstimate(
        flops=2 * N_FRAMES * D_EMB * (FRAME_LEN + S_FULL) + 4 * N_FRAMES * FRAME_LEN,
        transcendentals=N_FRAMES * (D_EMB + 2),
        bytes_accessed=(2 * N_FRAMES * FRAME_LEN * 4              # frames in + masked out
                        + N_TILES * PACK_ROWS * TILE * 4          # packed out
                        + (8 * FRAME_LEN + D_EMB + 1) * 4         # w_det, b_emb, b_det
                        + 2 * FRAME_LEN * D_EMB * 2))             # w_emb + centroids (bf16)

    masked, packed = pl.pallas_call(
        _diar_kernel,
        grid=(N_TILES,),
        in_specs=[
            pl.BlockSpec((TILE, FRAME_LEN), lambda i: (i, 0)),      # frames tile
            pl.BlockSpec((8, FRAME_LEN), lambda i: (0, 0)),         # w_det (replicated rows)
            pl.BlockSpec(memory_space=pltpu.MemorySpace.SMEM),      # b_det scalar in SMEM
            pl.BlockSpec((FRAME_LEN, D_EMB), lambda i: (0, 0)),     # w_emb
            pl.BlockSpec((1, D_EMB), lambda i: (0, 0)),             # b_emb
            pl.BlockSpec((S_FULL, D_EMB), lambda i: (0, 0)),        # centroids (padded)
        ],
        out_specs=[
            pl.BlockSpec((TILE, FRAME_LEN), lambda i: (i, 0)),      # masked frames (f32)
            pl.BlockSpec((PACK_ROWS, TILE), lambda i: (i, 0)),      # tiny packed slab
        ],
        out_shape=[
            jax.ShapeDtypeStruct((N_FRAMES, FRAME_LEN), jnp.float32),
            jax.ShapeDtypeStruct((N_TILES * PACK_ROWS, TILE), jnp.float32),
        ],
        compiler_params=pltpu.CompilerParams(
            dimension_semantics=("parallel",)),
        cost_estimate=cost,
    )(frames, params["w_det"], params["b_det"],
      params["w_emb"], params["b_emb"], params["centroids"])

    # Glue (plain JAX): un-frame the masked waveform, unpack score / label.
    masked_wave = masked.reshape(T_SAMPLES)
    pk = packed.reshape(N_TILES, PACK_ROWS, TILE)
    scores = pk[:, 0, :].reshape(N_FRAMES, 1)                    # (N, 1) f32
    labels = pk[:, 1, :].reshape(N_FRAMES).astype(jnp.int32)     # (N,)   int32
    return scores, masked_wave, labels


def init_params(key):
    k1, k2, k3 = jax.random.split(key, 3)
    # Full detection weights, then collapse algebraically host-side.
    w_det_full = jax.random.normal(k1, (FRAME_LEN, D_EMB), jnp.float32) * 0.05
    b_det_full = jnp.zeros((1, D_EMB), jnp.float32)
    w_det_vec = jnp.mean(w_det_full, axis=1).reshape(1, FRAME_LEN)
    w_det = jnp.tile(w_det_vec, (8, 1))                          # (8, F) replicated rows
    b_det = jnp.mean(b_det_full).reshape(1, 1)                   # (1, 1) -> SMEM scalar

    w_emb = (jax.random.normal(k2, (FRAME_LEN, D_EMB), jnp.float32)
             * 0.05).astype(jnp.bfloat16)
    b_emb = jnp.zeros((1, D_EMB), jnp.float32)

    cent = jax.random.normal(k3, (S_FULL, D_EMB), jnp.float32)
    # zero padding rows beyond MAX_SPK (only rows 0..2 are used in-kernel)
    cent = cent.at[MAX_SPK:].set(0.0).astype(jnp.bfloat16)
    return {"w_det": w_det, "b_det": b_det,
            "w_emb": w_emb, "b_emb": b_emb, "centroids": cent}


if __name__ == "__main__":
    key = jax.random.PRNGKey(0)
    k_audio, k_params = jax.random.split(key)
    audio = jax.random.normal(k_audio, (T_SAMPLES,), jnp.float32) * 0.1
    params = init_params(k_params)

    scores, masked_wave, labels = speaker_diarization_forward(audio, params)
    jax.block_until_ready((scores, masked_wave, labels))

    assert scores.shape == (N_FRAMES, 1)
    assert masked_wave.shape == (T_SAMPLES,)
    assert labels.shape == (N_FRAMES,)
    assert bool(jnp.all((labels >= 0) & (labels < MAX_SPK)))
    print("KERNEL_OK")
</pallas_src>

<mosaic_0001>
module attributes {stable_mosaic.version = 11 : i64} {
  func.func @_diar_kernel(%arg0: i32, %arg1: memref<512x128xf32, #tpu.memory_space<vmem>>, %arg2: memref<8x128xf32, #tpu.memory_space<vmem>>, %arg3: memref<1x1xf32, #tpu.memory_space<smem>>, %arg4: memref<128x128xbf16, #tpu.memory_space<vmem>>, %arg5: memref<1x128xf32, #tpu.memory_space<vmem>>, %arg6: memref<128x128xbf16, #tpu.memory_space<vmem>>, %arg7: memref<512x128xf32, #tpu.memory_space<vmem>>, %arg8: memref<8x512xf32, #tpu.memory_space<vmem>>) attributes {dimension_semantics = [#tpu.dimension_semantics<parallel>], iteration_bounds = array<i64: 4>, scalar_prefetch = 0 : i64, scratch_operands = 0 : i64, tpu.core_type = #tpu.core_type<tc>, window_params = [{transform_indices = @transform_0, window_bounds = array<i64: 512, 128>}, {pipeline_mode = #tpu.pipeline_mode<synchronous>, transform_indices = @transform_1, window_bounds = array<i64: 8, 128>}, {transform_indices = @transform_2, window_bounds = array<i64: 1, 1>}, {pipeline_mode = #tpu.pipeline_mode<synchronous>, transform_indices = @transform_3, window_bounds = array<i64: 128, 128>}, {pipeline_mode = #tpu.pipeline_mode<synchronous>, transform_indices = @transform_4, window_bounds = array<i64: 1, 128>}, {pipeline_mode = #tpu.pipeline_mode<synchronous>, transform_indices = @transform_5, window_bounds = array<i64: 128, 128>}, {transform_indices = @transform_6, window_bounds = array<i64: 512, 128>}, {transform_indices = @transform_7, window_bounds = array<i64: 8, 512>}]} {
    %c0 = arith.constant 0 : index
    %c0_0 = arith.constant 0 : index
    %0 = vector.load %arg1[%c0, %c0_0] : memref<512x128xf32, #tpu.memory_space<vmem>>, vector<512x128xf32>
    %c0_1 = arith.constant 0 : index
    %c0_2 = arith.constant 0 : index
    %1 = memref.load %arg3[%c0_1, %c0_2] : memref<1x1xf32, #tpu.memory_space<smem>>
    %c0_3 = arith.constant 0 : index
    %c0_4 = arith.constant 0 : index
    %2 = vector.load %arg2[%c0_3, %c0_4] : memref<8x128xf32, #tpu.memory_space<vmem>>, vector<1x128xf32>
    %3 = vector.broadcast %2 : vector<1x128xf32> to vector<512x128xf32>
    %4 = arith.mulf %0, %3 : vector<512x128xf32>
    %cst = arith.constant dense<0.000000e+00> : vector<512xf32>
    %5 = vector.multi_reduction <add>, %4, %cst [1] : vector<512x128xf32> to vector<512xf32>
    %6 = vector.shape_cast %5 : vector<512xf32> to vector<512x1xf32>
    %7 = vector.broadcast %1 : f32 to vector<512x1xf32>
    %8 = arith.addf %6, %7 : vector<512x1xf32>
    %9 = arith.negf %8 : vector<512x1xf32>
    %10 = math.exp %9 : vector<512x1xf32>
    %cst_5 = arith.constant 1.000000e+00 : f32
    %11 = vector.broadcast %cst_5 : f32 to vector<512x1xf32>
    %12 = arith.addf %11, %10 : vector<512x1xf32>
    %13 = arith.divf %11, %12 : vector<512x1xf32>
    %cst_6 = arith.constant 5.000000e-03 : f32
    %14 = vector.broadcast %cst_6 : f32 to vector<512x1xf32>
    %15 = arith.cmpf ogt, %13, %14 : vector<512x1xf32>
    %16 = arith.extui %15 : vector<512x1xi1> to vector<512x1xi32>
    %17 = arith.sitofp %16 : vector<512x1xi32> to vector<512x1xf32>
    %18 = vector.broadcast %17 : vector<512x1xf32> to vector<512x128xf32>
    %19 = arith.mulf %0, %18 : vector<512x128xf32>
    %c0_7 = arith.constant 0 : index
    %c0_8 = arith.constant 0 : index
    %20 = vector.load %arg7[%c0_7, %c0_8] : memref<512x128xf32, #tpu.memory_space<vmem>>, vector<512x128xf32>
    tpu.vector_store %arg7[%c0_7, %c0_8], %19 {strides = array<i32>} : memref<512x128xf32, #tpu.memory_space<vmem>>, vector<512x128xf32>,
    %21 = arith.truncf %19 : vector<512x128xf32> to vector<512x128xbf16>
    %c0_9 = arith.constant 0 : index
    %c0_10 = arith.constant 0 : index
    %22 = vector.load %arg4[%c0_9, %c0_10] : memref<128x128xbf16, #tpu.memory_space<vmem>>, vector<128x128xbf16>
    %cst_11 = arith.constant dense<0.000000e+00> : vector<512x128xf32>
    %23 = tpu.matmul %21, %22, %cst_11 {dimension_numbers = #tpu.dot_dimension_numbers<[1], [0], [0], [1], [0, 0, 1, 1], [], []>} : vector<512x128xbf16>, vector<128x128xbf16>, vector<512x128xf32> -> vector<512x128xf32>
    %c0_12 = arith.constant 0 : index
    %c0_13 = arith.constant 0 : index
    %24 = vector.load %arg5[%c0_12, %c0_13] : memref<1x128xf32, #tpu.memory_space<vmem>>, vector<1x128xf32>
    %25 = vector.broadcast %24 : vector<1x128xf32> to vector<512x128xf32>
    %26 = arith.addf %23, %25 : vector<512x128xf32>
    %27 = math.tanh %26 : vector<512x128xf32>
    %c0_14 = arith.constant 0 : index
    %c0_15 = arith.constant 0 : index
    %28 = vector.load %arg6[%c0_14, %c0_15] : memref<128x128xbf16, #tpu.memory_space<vmem>>, vector<128x128xbf16>
    %29 = arith.truncf %27 : vector<512x128xf32> to vector<512x128xbf16>
    %cst_16 = arith.constant dense<0.000000e+00> : vector<128x512xf32>
    %30 = tpu.matmul %28, %29, %cst_16 {dimension_numbers = #tpu.dot_dimension_numbers<[1], [1], [0], [0], [0, 0, 1, 0], [], []>} : vector<128x128xbf16>, vector<512x128xbf16>, vector<128x512xf32> -> vector<128x512xf32>
    %c0_17 = arith.constant 0 : index
    %c0_18 = arith.constant 0 : index
    %31 = vector.load %arg2[%c0_17, %c0_18] : memref<8x128xf32, #tpu.memory_space<vmem>>, vector<8x128xf32>
    %cst_19 = arith.constant dense<0.000000e+00> : vector<8x512xf32>
    %32 = tpu.matmul %31, %0, %cst_19 {dimension_numbers = #tpu.dot_dimension_numbers<[1], [1], [0], [0], [0, 0, 1, 0], [], []>} : vector<8x128xf32>, vector<512x128xf32>, vector<8x512xf32> -> vector<8x512xf32>
    %33 = vector.extract_strided_slice %32 {offsets = [0, 0], sizes = [1, 512], strides = [1, 1]} : vector<8x512xf32> to vector<1x512xf32>
    %34 = vector.broadcast %1 : f32 to vector<1x512xf32>
    %35 = arith.addf %33, %34 : vector<1x512xf32>
    %36 = arith.negf %35 : vector<1x512xf32>
    %37 = math.exp %36 : vector<1x512xf32>
    %cst_20 = arith.constant 1.000000e+00 : f32
    %38 = vector.broadcast %cst_20 : f32 to vector<1x512xf32>
    %39 = arith.addf %38, %37 : vector<1x512xf32>
    %40 = arith.divf %38, %39 : vector<1x512xf32>
    %41 = vector.extract_strided_slice %30 {offsets = [0, 0], sizes = [1, 512], strides = [1, 1]} : vector<128x512xf32> to vector<1x512xf32>
    %42 = vector.extract_strided_slice %30 {offsets = [1, 0], sizes = [1, 512], strides = [1, 1]} : vector<128x512xf32> to vector<1x512xf32>
    %43 = vector.extract_strided_slice %30 {offsets = [2, 0], sizes = [1, 512], strides = [1, 1]} : vector<128x512xf32> to vector<1x512xf32>
    %44 = arith.maximumf %41, %42 : vector<1x512xf32>
    %45 = arith.cmpf ogt, %42, %41 : vector<1x512xf32>
    %cst_21 = arith.constant 1.000000e+00 : f32
    %cst_22 = arith.constant 0.000000e+00 : f32
    %46 = vector.broadcast %cst_21 : f32 to vector<1x512xf32>
    %47 = vector.broadcast %cst_22 : f32 to vector<1x512xf32>
    %48 = arith.select %45, %46, %47 : vector<1x512xi1>, vector<1x512xf32>
    %49 = arith.cmpf ogt, %43, %44 : vector<1x512xf32>
    %cst_23 = arith.constant 2.000000e+00 : f32
    %50 = vector.broadcast %cst_23 : f32 to vector<1x512xf32>
    %51 = arith.select %49, %50, %48 : vector<1x512xi1>, vector<1x512xf32>
    %52 = tpu.iota {dimensions = array<i32: 0>} : vector<8x512xi32>
    %cst_24 = arith.constant 0.000000e+00 : f32
    %53 = vector.broadcast %cst_24 : f32 to vector<8x512xf32>
    %c0_i32 = arith.constant 0 : i32
    %54 = vector.broadcast %c0_i32 : i32 to vector<8x512xi32>
    %55 = arith.cmpi eq, %52, %54 : vector<8x512xi32>
    %56 = vector.shape_cast %40 : vector<1x512xf32> to vector<1x512xf32>
    %57 = vector.broadcast %56 : vector<1x512xf32> to vector<8x512xf32>
    %58 = arith.select %55, %57, %53 : vector<8x512xi1>, vector<8x512xf32>
    %c1_i32 = arith.constant 1 : i32
    %59 = vector.broadcast %c1_i32 : i32 to vector<8x512xi32>
    %60 = arith.cmpi eq, %52, %59 : vector<8x512xi32>
    %61 = vector.shape_cast %51 : vector<1x512xf32> to vector<1x512xf32>
    %62 = vector.broadcast %61 : vector<1x512xf32> to vector<8x512xf32>
    %63 = arith.select %60, %62, %58 : vector<8x512xi1>, vector<8x512xf32>
    %c2_i32 = arith.constant 2 : i32
    %64 = vector.broadcast %c2_i32 : i32 to vector<8x512xi32>
    %65 = arith.cmpi eq, %52, %64 : vector<8x512xi32>
    %66 = vector.shape_cast %41 : vector<1x512xf32> to vector<1x512xf32>
    %67 = vector.broadcast %66 : vector<1x512xf32> to vector<8x512xf32>
    %68 = arith.select %65, %67, %63 : vector<8x512xi1>, vector<8x512xf32>
    %c3_i32 = arith.constant 3 : i32
    %69 = vector.broadcast %c3_i32 : i32 to vector<8x512xi32>
    %70 = arith.cmpi eq, %52, %69 : vector<8x512xi32>
    %71 = vector.shape_cast %42 : vector<1x512xf32> to vector<1x512xf32>
    %72 = vector.broadcast %71 : vector<1x512xf32> to vector<8x512xf32>
    %73 = arith.select %70, %72, %68 : vector<8x512xi1>, vector<8x512xf32>
    %c4_i32 = arith.constant 4 : i32
    %74 = vector.broadcast %c4_i32 : i32 to vector<8x512xi32>
    %75 = arith.cmpi eq, %52, %74 : vector<8x512xi32>
    %76 = vector.shape_cast %43 : vector<1x512xf32> to vector<1x512xf32>
    %77 = vector.broadcast %76 : vector<1x512xf32> to vector<8x512xf32>
    %78 = arith.select %75, %77, %73 : vector<8x512xi1>, vector<8x512xf32>
    %c0_25 = arith.constant 0 : index
    %c0_26 = arith.constant 0 : index
    %79 = vector.load %arg8[%c0_25, %c0_26] : memref<8x512xf32, #tpu.memory_space<vmem>>, vector<8x512xf32>
    tpu.vector_store %arg8[%c0_25, %c0_26], %78 {strides = array<i32>} : memref<8x512xf32, #tpu.memory_space<vmem>>, vector<8x512xf32>,
    return
  }
  func.func @transform_0(%arg0: i32) -> (i32, i32) {
    %c0_i32 = arith.constant 0 : i32
    %c0_i32_0 = arith.constant 0 : i32
    return %arg0, %c0_i32 : i32, i32
  }
  func.func @transform_1(%arg0: i32) -> (i32, i32) {
    %c0_i32 = arith.constant 0 : i32
    %c0_i32_0 = arith.constant 0 : i32
    %c0_i32_1 = arith.constant 0 : i32
    return %c0_i32, %c0_i32_0 : i32, i32
  }
  func.func @transform_2(%arg0: i32) -> (i32, i32) {
    %c0_i32 = arith.constant 0 : i32
    %c0_i32_0 = arith.constant 0 : i32
    %c0_i32_1 = arith.constant 0 : i32
    return %c0_i32, %c0_i32_0 : i32, i32
  }
  func.func @transform_3(%arg0: i32) -> (i32, i32) {
    %c0_i32 = arith.constant 0 : i32
    %c0_i32_0 = arith.constant 0 : i32
    %c0_i32_1 = arith.constant 0 : i32
    return %c0_i32, %c0_i32_0 : i32, i32
  }
  func.func @transform_4(%arg0: i32) -> (i32, i32) {
    %c0_i32 = arith.constant 0 : i32
    %c0_i32_0 = arith.constant 0 : i32
    %c0_i32_1 = arith.constant 0 : i32
    return %c0_i32, %c0_i32_0 : i32, i32
  }
  func.func @transform_5(%arg0: i32) -> (i32, i32) {
    %c0_i32 = arith.constant 0 : i32
    %c0_i32_0 = arith.constant 0 : i32
    %c0_i32_1 = arith.constant 0 : i32
    return %c0_i32, %c0_i32_0 : i32, i32
  }
  func.func @transform_6(%arg0: i32) -> (i32, i32) {
    %c0_i32 = arith.constant 0 : i32
    %c0_i32_0 = arith.constant 0 : i32
    return %arg0, %c0_i32 : i32, i32
  }
  func.func @transform_7(%arg0: i32) -> (i32, i32) {
    %c0_i32 = arith.constant 0 : i32
    %c0_i32_0 = arith.constant 0 : i32
    return %arg0, %c0_i32 : i32, i32
  }
}

</mosaic_0001>

<llo_original>
// kernel: tpu_custom_call.1
$region0: #{tpu_custom_call.1}
  #allocation0 [shape = 'u32[]', space=smem, size = 0x4, offset = 0x4, fixed_abs, tag = 'smem constant byte address 0x4 - core index']
  #allocation1 [shape = 'u32[144,128]{1,0:T(1,128)}', space=vmem, size = 0x12000, scoped, tag = 'internal scratch']
  #allocation2 [shape = 'f32[1,1]{1,0:T(1,128)S(6)}', space=smem, size = 0x200, scoped, tag = 'scoped memory for tpu_custom_call.1']
  %s0 = inlined_call_operand.hbm [shape: f32[2048,128], index: 0, kind: input, shape index: {}]
  %s1 = inlined_call_operand.hbm [shape: f32[8,128], index: 1, kind: input, shape index: {}]
  %s2 = inlined_call_operand.<no memory space> [shape: f32[1,1], index: 2, kind: input, shape index: {}]
  %s3 = inlined_call_operand.hbm [shape: bf16[128,128], index: 3, kind: input, shape index: {}]
  %s4 = inlined_call_operand.vmem [shape: f32[1,128], index: 4, kind: input, shape index: {}]
  %s5 = inlined_call_operand.hbm [shape: bf16[128,128], index: 5, kind: input, shape index: {}]
  %s6 = inlined_call_operand.hbm [shape: f32[2048,128], index: 6, kind: output, shape index: {0}]
  %s7 = inlined_call_operand.hbm [shape: f32[32,512], index: 7, kind: output, shape index: {1}]
  %8 = xla_tuple %s6, %s7
  %s9 = sld [smem:[#allocation0]]
  $region81: #{tpu_custom_call.1} parent=0
    _
  %s11 = ssub.s32 1, %s9
  %s12 = scalar_select 0, %s11, %s9
  %13 = sst [smem:[#allocation2]] %s2
  $region1: #{tpu_custom_call.1} parent=0
    #allocation3 [shape = 'u8[524288]{0}', space=vmem, size = 0x80000, scoped, tag = 'input window, operand 0']
    #allocation4 [shape = 's32[2]{0}', space=sflag, size = 0x8, scoped, tag = 'scoped memory for tpu_custom_call.1']
    #allocation5 [shape = 's32[2]{0}', space=sflag, size = 0x8, scoped, tag = 'scoped memory for tpu_custom_call.1']
    #allocation6 [shape = 'u8[4096]{0}', space=vmem, size = 0x1000, scoped, tag = 'input window, operand 1, single buffered']
    #allocation7 [shape = 's32[1]{0}', space=sflag, size = 0x4, scoped, tag = 'scoped memory for tpu_custom_call.1']
    #allocation8 [shape = 'u8[32768]{0}', space=vmem, size = 0x8000, scoped, tag = 'input window, operand 3, single buffered']
    #allocation9 [shape = 'u8[32768]{0}', space=vmem, size = 0x8000, scoped, tag = 'input window, operand 5, single buffered']
    #allocation10 [shape = 's32[1]{0}', space=sflag, size = 0x4, scoped, tag = 'scoped memory for tpu_custom_call.1']
    #allocation11 [shape = 'u8[524288]{0}', space=vmem, size = 0x80000, scoped, tag = 'output window, operand 0']
    #allocation12 [shape = 'u8[32768]{0}', space=vmem, size = 0x8000, scoped, tag = 'output window, operand 1']
    #allocation13 [shape = 's32[2]{0}', space=sflag, size = 0x8, scoped, tag = 'scoped memory for tpu_custom_call.1']
    %14 = vsyncpa [#allocation4], 0
    %s15 = scalar_lea.sflag [#allocation4], 1
    %16 = vsyncpa %s15, 0
    %17 = vsyncpa [#allocation7], 0
    %18 = vsyncpa [#allocation10], 0
    %19 = vsyncpa [#allocation5], 0
    %s20 = scalar_lea.sflag [#allocation5], 1
    %21 = vsyncpa %s20, 0
    %22 = vsyncpa [#allocation13], 0
    %s23 = scalar_lea.sflag [#allocation13], 1
    %24 = vsyncpa %s23, 0
    loop: start=0, step=1, limit=6
    $region2: #{tpu_custom_call.1} parent=1 // loop_pre_header
      _
    $region3: #{tpu_custom_call.1} parent=1 // loop_header
      %s26 = sphi 0, %s30
      %p27 = scmp.ge.s32.totalorder %s26, 6
      %s36 = sphi 0, %s38
      %s39 = sphi 0, %s36
      %s40 = sphi 0, %s39
      %s56 = sphi 0, %s40
      %s60 = sphi 0, %s60
      %s62 = sphi 0, %s60
      %s63 = sphi 0, %s62
      %s77 = sphi 0, %s63
      %s81 = sphi 0, %s81
      %s83 = sphi 0, %s81
      %s84 = sphi 0, %s83
      %s98 = sphi 0, %s84
      %s102 = sphi 0, %s102
      %s104 = sphi 0, %s102
      %s105 = sphi 0, %s104
      %s119 = sphi 0, %s105
      %s123 = sphi 0, %s123
      %s125 = sphi 0, %s123
      %s126 = sphi 0, %s125
      %s140 = sphi 0, %s126
      %s144 = sphi 0, %s144
      %s146 = sphi 0, %s144
      %s147 = sphi 0, %s146
      %s161 = sphi 0, %s147
      %s167 = sphi 0, %s169
      %s170 = sphi 0, %s167
      %s171 = sphi 0, %s170
      %s187 = sphi 0, %s171
      %s193 = sphi 0, %s195
      %s196 = sphi 0, %s193
      %s197 = sphi 0, %s196
      %s213 = sphi 0, %s197
    $region4: #{tpu_custom_call.1} parent=1 // loop_header_branch
      %29 = sbr.rel (%p27) target = $region8
    $region5: #{tpu_custom_call.1} parent=1 // loop_body
      %s31 = ssub.s32 %s26, 1
      %s32 = ssub.s32 %s26, 2
      %s33 = sadd.s32 %s26, 1
      %s34 = ssub.s32 %s26, %s33
      %p35 = scmp.eq.s32.totalorder %s34, 0
      %s37 = sadd.s32 %s36, 1
      %s38 = scalar_select %p35, %s36, %s37
      %p41 = pneg %p35
      %p42 = scmp.eq.s32.totalorder %s26, 3
      %p43 = por %p41, %p42
      %p44 = scmp.ne.s32.totalorder %s36, %s39
      %p45 = scmp.eq.s32.totalorder %s26, 0
      %p46 = por %p44, %p45
      %p47 = scmp.ne.s32.totalorder %s36, %s39
      %p48 = scmp.eq.s32.totalorder %s31, 3
      %p49 = por %p47, %p48
      %p50 = scmp.ne.s32.totalorder %s39, %s40
      %p51 = scmp.eq.s32.totalorder %s31, 0
      %p52 = por %p50, %p51
      %p53 = scmp.ne.s32.totalorder %s39, %s40
      %p54 = scmp.eq.s32.totalorder %s32, 3
      %p55 = por %p53, %p54
      %p57 = scmp.ne.s32.totalorder %s40, %s56
      %p58 = scmp.eq.s32.totalorder %s32, 0
      %p59 = por %p57, %p58
      %s61 = sadd.s32 %s60, 1
      %p64 = scmp.eq.s32.totalorder %s26, 3
      %p65 = scmp.ne.s32.totalorder %s60, %s62
      %p66 = scmp.eq.s32.totalorder %s26, 0
      %p67 = por %p65, %p66
      %p68 = scmp.ne.s32.totalorder %s60, %s62
      %p69 = scmp.eq.s32.totalorder %s31, 3
      %p70 = por %p68, %p69
      %p71 = scmp.ne.s32.totalorder %s62, %s63
      %p72 = scmp.eq.s32.totalorder %s31, 0
      %p73 = por %p71, %p72
      %p74 = scmp.ne.s32.totalorder %s62, %s63
      %p75 = scmp.eq.s32.totalorder %s32, 3
      %p76 = por %p74, %p75
      %p78 = scmp.ne.s32.totalorder %s63, %s77
      %p79 = scmp.eq.s32.totalorder %s32, 0
      %p80 = por %p78, %p79
      %s82 = sadd.s32 %s81, 1
      %p85 = scmp.eq.s32.totalorder %s26, 3
      %p86 = scmp.ne.s32.totalorder %s81, %s83
      %p87 = scmp.eq.s32.totalorder %s26, 0
      %p88 = por %p86, %p87
      %p89 = scmp.ne.s32.totalorder %s81, %s83
      %p90 = scmp.eq.s32.totalorder %s31, 3
      %p91 = por %p89, %p90
      %p92 = scmp.ne.s32.totalorder %s83, %s84
      %p93 = scmp.eq.s32.totalorder %s31, 0
      %p94 = por %p92, %p93
      %p95 = scmp.ne.s32.totalorder %s83, %s84
      %p96 = scmp.eq.s32.totalorder %s32, 3
      %p97 = por %p95, %p96
      %p99 = scmp.ne.s32.totalorder %s84, %s98
      %p100 = scmp.eq.s32.totalorder %s32, 0
      %p101 = por %p99, %p100
      %s103 = sadd.s32 %s102, 1
      %p106 = scmp.eq.s32.totalorder %s26, 3
      %p107 = scmp.ne.s32.totalorder %s102, %s104
      %p108 = scmp.eq.s32.totalorder %s26, 0
      %p109 = por %p107, %p108
      %p110 = scmp.ne.s32.totalorder %s102, %s104
      %p111 = scmp.eq.s32.totalorder %s31, 3
      %p112 = por %p110, %p111
      %p113 = scmp.ne.s32.totalorder %s104, %s105
      %p114 = scmp.eq.s32.totalorder %s31, 0
      %p115 = por %p113, %p114
      %p116 = scmp.ne.s32.totalorder %s104, %s105
      %p117 = scmp.eq.s32.totalorder %s32, 3
      %p118 = por %p116, %p117
      %p120 = scmp.ne.s32.totalorder %s105, %s119
      %p121 = scmp.eq.s32.totalorder %s32, 0
      %p122 = por %p120, %p121
      %s124 = sadd.s32 %s123, 1
      %p127 = scmp.eq.s32.totalorder %s26, 3
      %p128 = scmp.ne.s32.totalorder %s123, %s125
      %p129 = scmp.eq.s32.totalorder %s26, 0
      %p130 = por %p128, %p129
      %p131 = scmp.ne.s32.totalorder %s123, %s125
      %p132 = scmp.eq.s32.totalorder %s31, 3
      %p133 = por %p131, %p132
      %p134 = scmp.ne.s32.totalorder %s125, %s126
      %p135 = scmp.eq.s32.totalorder %s31, 0
      %p136 = por %p134, %p135
      %p137 = scmp.ne.s32.totalorder %s125, %s126
      %p138 = scmp.eq.s32.totalorder %s32, 3
      %p139 = por %p137, %p138
      %p141 = scmp.ne.s32.totalorder %s126, %s140
      %p142 = scmp.eq.s32.totalorder %s32, 0
      %p143 = por %p141, %p142
      %s145 = sadd.s32 %s144, 1
      %p148 = scmp.eq.s32.totalorder %s26, 3
      %p149 = scmp.ne.s32.totalorder %s144, %s146
      %p150 = scmp.eq.s32.totalorder %s26, 0
      %p151 = por %p149, %p150
      %p152 = scmp.ne.s32.totalorder %s144, %s146
      %p153 = scmp.eq.s32.totalorder %s31, 3
      %p154 = por %p152, %p153
      %p155 = scmp.ne.s32.totalorder %s146, %s147
      %p156 = scmp.eq.s32.totalorder %s31, 0
      %p157 = por %p155, %p156
      %p158 = scmp.ne.s32.totalorder %s146, %s147
      %p159 = scmp.eq.s32.totalorder %s32, 3
      %p160 = por %p158, %p159
      %p162 = scmp.ne.s32.totalorder %s147, %s161
      %p163 = scmp.eq.s32.totalorder %s32, 0
      %p164 = por %p162, %p163
      %s165 = ssub.s32 %s26, %s33
      %p166 = scmp.eq.s32.totalorder %s165, 0
      %s168 = sadd.s32 %s167, 1
      %s169 = scalar_select %p166, %s167, %s168
      %p172 = pneg %p166
      %p173 = scmp.eq.s32.totalorder %s26, 3
      %p174 = por %p172, %p173
      %p175 = scmp.ne.s32.totalorder %s167, %s170
      %p176 = scmp.eq.s32.totalorder %s26, 0
      %p177 = por %p175, %p176
      %p178 = scmp.ne.s32.totalorder %s167, %s170
      %p179 = scmp.eq.s32.totalorder %s31, 3
      %p180 = por %p178, %p179
      %p181 = scmp.ne.s32.totalorder %s170, %s171
      %p182 = scmp.eq.s32.totalorder %s31, 0
      %p183 = por %p181, %p182
      %p184 = scmp.ne.s32.totalorder %s170, %s171
      %p185 = scmp.eq.s32.totalorder %s32, 3
      %p186 = por %p184, %p185
      %p188 = scmp.ne.s32.totalorder %s171, %s187
      %p189 = scmp.eq.s32.totalorder %s32, 0
      %p190 = por %p188, %p189
      %s191 = ssub.s32 %s26, %s33
      %p192 = scmp.eq.s32.totalorder %s191, 0
      %s194 = sadd.s32 %s193, 1
      %s195 = scalar_select %p192, %s193, %s194
      %p198 = pneg %p192
      %p199 = scmp.eq.s32.totalorder %s26, 3
      %p200 = por %p198, %p199
      %p201 = scmp.ne.s32.totalorder %s193, %s196
      %p202 = scmp.eq.s32.totalorder %s26, 0
      %p203 = por %p201, %p202
      %p204 = scmp.ne.s32.totalorder %s193, %s196
      %p205 = scmp.eq.s32.totalorder %s31, 3
      %p206 = por %p204, %p205
      %p207 = scmp.ne.s32.totalorder %s196, %s197
      %p208 = scmp.eq.s32.totalorder %s31, 0
      %p209 = por %p207, %p208
      %p210 = scmp.ne.s32.totalorder %s196, %s197
      %p211 = scmp.eq.s32.totalorder %s32, 3
      %p212 = por %p210, %p211
      %p214 = scmp.ne.s32.totalorder %s197, %s213
      %p215 = scmp.eq.s32.totalorder %s32, 0
      %p216 = por %p214, %p215
      %p217 = scmp.le.s32.totalorder 1, %s26
      %p218 = scmp.lt.s32.totalorder %s26, 5
      %p219 = pnand %p217, %p218
      %p220 = pneg %p219
      // Predicated region
      $region9: #{tpu_custom_call.1} parent=5 // pred_check
        _
      $region10: #{tpu_custom_call.1} parent=5 // pred_check_branch
        %222 = sbr.rel (%p219) target = $region12
      $region11: #{tpu_custom_call.1} parent=5 // pred_region
        %s223 = ssub.s32 %s26, 1
        // Predicated region
        $region13: #{tpu_custom_call.1} parent=11 // pred_check
          %p224 = pneg %p73
        $region14: #{tpu_custom_call.1} parent=11 // pred_check_branch
          %226 = sbr.rel (%p224) target = $region16
        $region15: #{tpu_custom_call.1} parent=11 // pred_region
          %s228 = ssub.s32 128, 128
          %229 = vsyncadd [#allocation7], %s228
          %s231 = sshll.u32 [#allocation6], 4
          %s232 = int_to_ptr.vmem [resolvable:$true] %s231
          %234 = dma.hbm_to_vmem [thread:$0]  %s1, 128, %s232, [#allocation7]
        $region16: #{tpu_custom_call.1} parent=11 // pred_fallthru
          _
        // Predicated region
        $region17: #{tpu_custom_call.1} parent=11 // pred_check
          %p235 = pneg %p94
        $region18: #{tpu_custom_call.1} parent=11 // pred_check_branch
          %237 = sbr.rel (%p235) target = $region20
        $region19: #{tpu_custom_call.1} parent=11 // pred_region
          _
        $region20: #{tpu_custom_call.1} parent=11 // pred_fallthru
          _
        // Predicated region
        $region21: #{tpu_custom_call.1} parent=11 // pred_check
          %p238 = pneg %p115
        $region22: #{tpu_custom_call.1} parent=11 // pred_check_branch
          %240 = sbr.rel (%p238) target = $region24
        $region23: #{tpu_custom_call.1} parent=11 // pred_region
          %s242 = ssub.s32 1024, 1024
          %243 = vsyncadd [#allocation7], %s242
          %s244 = sshll.u32 [#allocation8], 4
          %s245 = int_to_ptr.vmem [resolvable:$true] %s244
          %250 = dma.hbm_to_vmem [thread:$0]  %s3, 1024, %s245, [#allocation7], 64, 64, 4
        $region24: #{tpu_custom_call.1} parent=11 // pred_fallthru
          _
        // Predicated region
        $region25: #{tpu_custom_call.1} parent=11 // pred_check
          %p251 = pneg %p136
        $region26: #{tpu_custom_call.1} parent=11 // pred_check_branch
          %253 = sbr.rel (%p251) target = $region28
        $region27: #{tpu_custom_call.1} parent=11 // pred_region
          _
        $region28: #{tpu_custom_call.1} parent=11 // pred_fallthru
          _
        // Predicated region
        $region29: #{tpu_custom_call.1} parent=11 // pred_check
          %p254 = pneg %p157
        $region30: #{tpu_custom_call.1} parent=11 // pred_check_branch
          %256 = sbr.rel (%p254) target = $region32
        $region31: #{tpu_custom_call.1} parent=11 // pred_region
          %s258 = ssub.s32 1024, 1024
          %259 = vsyncadd [#allocation10], %s258
          %s260 = sshll.u32 [#allocation9], 4
          %s261 = int_to_ptr.vmem [resolvable:$true] %s260
          %266 = dma.hbm_to_vmem [thread:$0]  %s5, 1024, %s261, [#allocation10], 64, 64, 4
        $region32: #{tpu_custom_call.1} parent=11 // pred_fallthru
          _
      $region12: #{tpu_custom_call.1} parent=5 // pred_fallthru
        _
      %p267 = scmp.lt.s32.totalorder %s26, 4
      // Predicated region
      $region33: #{tpu_custom_call.1} parent=5 // pred_check
        %p268 = pneg %p267
      $region34: #{tpu_custom_call.1} parent=5 // pred_check_branch
        %270 = sbr.rel (%p268) target = $region36
      $region35: #{tpu_custom_call.1} parent=5 // pred_region
        // Predicated region
        $region37: #{tpu_custom_call.1} parent=35 // pred_check
          %p271 = pneg %p46
        $region38: #{tpu_custom_call.1} parent=35 // pred_check_branch
          %273 = sbr.rel (%p271) target = $region40
        $region39: #{tpu_custom_call.1} parent=35 // pred_region
          %s274 = sand.u32 %s36, 1
          %s275 = scalar_lea.sflag [#allocation4], %s274
          %s276 = sand.u32 %s36, 1
          %s277 = smul.addr %s276, 512
          %s278 = scalar_lea.vmem [#allocation3], %s277
          %s279 = smul.u32 64, %s26
          %s281 = ssub.s32 8192, 8192
          %282 = vsyncadd %s275, %s281
          %s283 = smul.addr %s279, 128
          %s284 = scalar_lea.hbm %s0, %s283
          %s285 = sshll.u32 %s278, 4
          %s286 = int_to_ptr.vmem [resolvable:$true] %s285
          %291 = dma.hbm_to_vmem [thread:$0]  %s284, 8192, %s286, %s275, 128, 128, 8
        $region40: #{tpu_custom_call.1} parent=35 // pred_fallthru
          _
      $region36: #{tpu_custom_call.1} parent=5 // pred_fallthru
        _
      %p292 = scmp.le.s32.totalorder 1, %s26
      %p293 = scmp.lt.s32.totalorder %s26, 5
      %p294 = pnand %p292, %p293
      %p295 = pneg %p294
      // Predicated region
      $region41: #{tpu_custom_call.1} parent=5 // pred_check
        _
      $region42: #{tpu_custom_call.1} parent=5 // pred_check_branch
        %297 = sbr.rel (%p294) target = $region44
      $region43: #{tpu_custom_call.1} parent=5 // pred_region
        %s298 = ssub.s32 %s26, 1
        %s299 = sand.u32 %s39, 1
        %s300 = scalar_lea.sflag [#allocation4], %s299
        %s301 = sand.u32 %s39, 1
        %s302 = smul.addr %s301, 512
        %s303 = scalar_lea.vmem [#allocation3], %s302
        // Predicated region
        $region45: #{tpu_custom_call.1} parent=43 // pred_check
          %p304 = pneg %p52
        $region46: #{tpu_custom_call.1} parent=43 // pred_check_branch
          %306 = sbr.rel (%p304) target = $region48
        $region47: #{tpu_custom_call.1} parent=43 // pred_region
          %307 = dma.done %s300, 8192
        $region48: #{tpu_custom_call.1} parent=43 // pred_fallthru
          _
        // Predicated region
        $region49: #{tpu_custom_call.1} parent=43 // pred_check
          %p308 = pneg %p73
        $region50: #{tpu_custom_call.1} parent=43 // pred_check_branch
          %310 = sbr.rel (%p308) target = $region52
        $region51: #{tpu_custom_call.1} parent=43 // pred_region
          %311 = dma.done [#allocation7], 128
        $region52: #{tpu_custom_call.1} parent=43 // pred_fallthru
          _
        // Predicated region
        $region53: #{tpu_custom_call.1} parent=43 // pred_check
          %p312 = pneg %p115
        $region54: #{tpu_custom_call.1} parent=43 // pred_check_branch
          %314 = sbr.rel (%p312) target = $region56
        $region55: #{tpu_custom_call.1} parent=43 // pred_region
          %315 = dma.done [#allocation7], 1024
        $region56: #{tpu_custom_call.1} parent=43 // pred_fallthru
          _
        // Predicated region
        $region57: #{tpu_custom_call.1} parent=43 // pred_check
          %p316 = pneg %p157
        $region58: #{tpu_custom_call.1} parent=43 // pred_check_branch
          %318 = sbr.rel (%p316) target = $region60
        $region59: #{tpu_custom_call.1} parent=43 // pred_region
          %319 = dma.done [#allocation10], 1024
        $region60: #{tpu_custom_call.1} parent=43 // pred_fallthru
          _
        %s320 = sand.u32 %s39, 1
        %s321 = scalar_lea.sflag [#allocation4], %s320
        %s322 = sand.u32 %s39, 1
        %s323 = smul.addr %s322, 512
        %s324 = scalar_lea.vmem [#allocation3], %s323
        %p325 = pneg %p52
        %p326 = pneg %p49
        %p327 = pneg %p73
        %p328 = pneg %p70
        %p329 = pneg %p94
        %p330 = pneg %p91
        %p331 = pneg %p115
        %p332 = pneg %p112
        %p333 = pneg %p136
        %p334 = pneg %p133
        %p335 = pneg %p157
        %p336 = pneg %p154
        %p337 = pneg %p183
        %p338 = pneg %p180
        %s339 = sand.u32 %s170, 1
        %s340 = scalar_lea.sflag [#allocation5], %s339
        %s341 = sand.u32 %s170, 1
        %s342 = smul.addr %s341, 512
        %s343 = scalar_lea.vmem [#allocation11], %s342
        %p344 = pneg %p209
        %p345 = pneg %p206
        %s346 = sand.u32 %s196, 1
        %s347 = scalar_lea.sflag [#allocation13], %s346
        %s348 = sand.u32 %s196, 1
        %s349 = smul.addr %s348, 32
        %s350 = scalar_lea.vmem [#allocation12], %s349
        %s351 = smul.u32 64, %s31
        %s352 = smul.u32 64, %s31
        %v354 = vld [vmem:[%s303] sm:$0xff]
        %v355 = vld [vmem:[%s303 + $0x8] sm:$0xff]
        %v356 = vld [vmem:[%s303 + $0x10] sm:$0xff]
        %v357 = vld [vmem:[%s303 + $0x18] sm:$0xff]
        %v358 = vld [vmem:[%s303 + $0x20] sm:$0xff]
        %v359 = vld [vmem:[%s303 + $0x28] sm:$0xff]
        %v360 = vld [vmem:[%s303 + $0x30] sm:$0xff]
        %v361 = vld [vmem:[%s303 + $0x38] sm:$0xff]
        %v362 = vld [vmem:[%s303 + $0x40] sm:$0xff]
        %v363 = vld [vmem:[%s303 + $0x48] sm:$0xff]
        %v364 = vld [vmem:[%s303 + $0x50] sm:$0xff]
        %v365 = vld [vmem:[%s303 + $0x58] sm:$0xff]
        %v366 = vld [vmem:[%s303 + $0x60] sm:$0xff]
        %v367 = vld [vmem:[%s303 + $0x68] sm:$0xff]
        %v368 = vld [vmem:[%s303 + $0x70] sm:$0xff]
        %v369 = vld [vmem:[%s303 + $0x78] sm:$0xff]
        %v370 = vld [vmem:[%s303 + $0x80] sm:$0xff]
        %v371 = vld [vmem:[%s303 + $0x88] sm:$0xff]
        %v372 = vld [vmem:[%s303 + $0x90] sm:$0xff]
        %v373 = vld [vmem:[%s303 + $0x98] sm:$0xff]
        %v374 = vld [vmem:[%s303 + $0xa0] sm:$0xff]
        %v375 = vld [vmem:[%s303 + $0xa8] sm:$0xff]
        %v376 = vld [vmem:[%s303 + $0xb0] sm:$0xff]
        %v377 = vld [vmem:[%s303 + $0xb8] sm:$0xff]
        %v378 = vld [vmem:[%s303 + $0xc0] sm:$0xff]
        %v379 = vld [vmem:[%s303 + $0xc8] sm:$0xff]
        %v380 = vld [vmem:[%s303 + $0xd0] sm:$0xff]
        %v381 = vld [vmem:[%s303 + $0xd8] sm:$0xff]
        %v382 = vld [vmem:[%s303 + $0xe0] sm:$0xff]
        %v383 = vld [vmem:[%s303 + $0xe8] sm:$0xff]
        %v384 = vld [vmem:[%s303 + $0xf0] sm:$0xff]
        %v385 = vld [vmem:[%s303 + $0xf8] sm:$0xff]
        %v386 = vld [vmem:[%s303 + $0x100] sm:$0xff]
        %v387 = vld [vmem:[%s303 + $0x108] sm:$0xff]
        %v388 = vld [vmem:[%s303 + $0x110] sm:$0xff]
        %v389 = vld [vmem:[%s303 + $0x118] sm:$0xff]
        %v390 = vld [vmem:[%s303 + $0x120] sm:$0xff]
        %v391 = vld [vmem:[%s303 + $0x128] sm:$0xff]
        %v392 = vld [vmem:[%s303 + $0x130] sm:$0xff]
        %v393 = vld [vmem:[%s303 + $0x138] sm:$0xff]
        %v394 = vld [vmem:[%s303 + $0x140] sm:$0xff]
        %v395 = vld [vmem:[%s303 + $0x148] sm:$0xff]
        %v396 = vld [vmem:[%s303 + $0x150] sm:$0xff]
        %v397 = vld [vmem:[%s303 + $0x158] sm:$0xff]
        %v398 = vld [vmem:[%s303 + $0x160] sm:$0xff]
        %v399 = vld [vmem:[%s303 + $0x168] sm:$0xff]
        %v400 = vld [vmem:[%s303 + $0x170] sm:$0xff]
        %v401 = vld [vmem:[%s303 + $0x178] sm:$0xff]
        %v402 = vld [vmem:[%s303 + $0x180] sm:$0xff]
        %v403 = vld [vmem:[%s303 + $0x188] sm:$0xff]
        %v404 = vld [vmem:[%s303 + $0x190] sm:$0xff]
        %v405 = vld [vmem:[%s303 + $0x198] sm:$0xff]
        %v406 = vld [vmem:[%s303 + $0x1a0] sm:$0xff]
        %v407 = vld [vmem:[%s303 + $0x1a8] sm:$0xff]
        %v408 = vld [vmem:[%s303 + $0x1b0] sm:$0xff]
        %v409 = vld [vmem:[%s303 + $0x1b8] sm:$0xff]
        %v410 = vld [vmem:[%s303 + $0x1c0] sm:$0xff]
        %v411 = vld [vmem:[%s303 + $0x1c8] sm:$0xff]
        %v412 = vld [vmem:[%s303 + $0x1d0] sm:$0xff]
        %v413 = vld [vmem:[%s303 + $0x1d8] sm:$0xff]
        %v414 = vld [vmem:[%s303 + $0x1e0] sm:$0xff]
        %v415 = vld [vmem:[%s303 + $0x1e8] sm:$0xff]
        %v416 = vld [vmem:[%s303 + $0x1f0] sm:$0xff]
        %v417 = vld [vmem:[%s303 + $0x1f8] sm:$0xff]
        %s418 = sld [smem:[#allocation2]]
        %v419 = vld [vmem:[#allocation6] sm:$0x1]
        %v420 = vlaneseq
        %v421 = vshrl.u32 %v420, 7
        %v422 = vsub.s32 0, %v421
        %v423 = vrot.slane %v419, %v422
        %v424 = vmul.f32 %v354, %v423
        %v425 = vmul.f32 %v355, %v423
        %v426 = vmul.f32 %v356, %v423
        %v427 = vmul.f32 %v357, %v423
        %v428 = vmul.f32 %v358, %v423
        %v429 = vmul.f32 %v359, %v423
        %v430 = vmul.f32 %v360, %v423
        %v431 = vmul.f32 %v361, %v423
        %v432 = vmul.f32 %v362, %v423
        %v433 = vmul.f32 %v363, %v423
        %v434 = vmul.f32 %v364, %v423
        %v435 = vmul.f32 %v365, %v423
        %v436 = vmul.f32 %v366, %v423
        %v437 = vmul.f32 %v367, %v423
        %v438 = vmul.f32 %v368, %v423
        %v439 = vmul.f32 %v369, %v423
        %v440 = vmul.f32 %v370, %v423
        %v441 = vmul.f32 %v371, %v423
        %v442 = vmul.f32 %v372, %v423
        %v443 = vmul.f32 %v373, %v423
        %v444 = vmul.f32 %v374, %v423
        %v445 = vmul.f32 %v375, %v423
        %v446 = vmul.f32 %v376, %v423
        %v447 = vmul.f32 %v377, %v423
        %v448 = vmul.f32 %v378, %v423
        %v449 = vmul.f32 %v379, %v423
        %v450 = vmul.f32 %v380, %v423
        %v451 = vmul.f32 %v381, %v423
        %v452 = vmul.f32 %v382, %v423
        %v453 = vmul.f32 %v383, %v423
        %v454 = vmul.f32 %v384, %v423
        %v455 = vmul.f32 %v385, %v423
        %v456 = vmul.f32 %v386, %v423
        %v457 = vmul.f32 %v387, %v423
        %v458 = vmul.f32 %v388, %v423
        %v459 = vmul.f32 %v389, %v423
        %v460 = vmul.f32 %v390, %v423
        %v461 = vmul.f32 %v391, %v423
        %v462 = vmul.f32 %v392, %v423
        %v463 = vmul.f32 %v393, %v423
        %v464 = vmul.f32 %v394, %v423
        %v465 = vmul.f32 %v395, %v423
        %v466 = vmul.f32 %v396, %v423
        %v467 = vmul.f32 %v397, %v423
        %v468 = vmul.f32 %v398, %v423
        %v469 = vmul.f32 %v399, %v423
        %v470 = vmul.f32 %v400, %v423
        %v471 = vmul.f32 %v401, %v423
        %v472 = vmul.f32 %v402, %v423
        %v473 = vmul.f32 %v403, %v423
        %v474 = vmul.f32 %v404, %v423
        %v475 = vmul.f32 %v405, %v423
        %v476 = vmul.f32 %v406, %v423
        %v477 = vmul.f32 %v407, %v423
        %v478 = vmul.f32 %v408, %v423
        %v479 = vmul.f32 %v409, %v423
        %v480 = vmul.f32 %v410, %v423
        %v481 = vmul.f32 %v411, %v423
        %v482 = vmul.f32 %v412, %v423
        %v483 = vmul.f32 %v413, %v423
        %v484 = vmul.f32 %v414, %v423
        %v485 = vmul.f32 %v415, %v423
        %v486 = vmul.f32 %v416, %v423
        %v487 = vmul.f32 %v417, %v423
        %488 = vadd.xlane.f32.xlu0 %v424
        %v489 = vpop.xlane.xlu0 %488
        %490 = vadd.xlane.f32.xlu0 %v425
        %v491 = vpop.xlane.xlu0 %490
        %492 = vadd.xlane.f32.xlu0 %v426
        %v493 = vpop.xlane.xlu0 %492
        %494 = vadd.xlane.f32.xlu0 %v427
        %v495 = vpop.xlane.xlu0 %494
        %496 = vadd.xlane.f32.xlu0 %v428
        %v497 = vpop.xlane.xlu0 %496
        %498 = vadd.xlane.f32.xlu0 %v429
        %v499 = vpop.xlane.xlu0 %498
        %500 = vadd.xlane.f32.xlu0 %v430
        %v501 = vpop.xlane.xlu0 %500
        %502 = vadd.xlane.f32.xlu0 %v431
        %v503 = vpop.xlane.xlu0 %502
        %504 = vadd.xlane.f32.xlu0 %v432
        %v505 = vpop.xlane.xlu0 %504
        %506 = vadd.xlane.f32.xlu0 %v433
        %v507 = vpop.xlane.xlu0 %506
        %508 = vadd.xlane.f32.xlu0 %v434
        %v509 = vpop.xlane.xlu0 %508
        %510 = vadd.xlane.f32.xlu0 %v435
        %v511 = vpop.xlane.xlu0 %510
        %512 = vadd.xlane.f32.xlu0 %v436
        %v513 = vpop.xlane.xlu0 %512
        %514 = vadd.xlane.f32.xlu0 %v437
        %v515 = vpop.xlane.xlu0 %514
        %516 = vadd.xlane.f32.xlu0 %v438
        %v517 = vpop.xlane.xlu0 %516
        %518 = vadd.xlane.f32.xlu0 %v439
        %v519 = vpop.xlane.xlu0 %518
        %520 = vadd.xlane.f32.xlu0 %v440
        %v521 = vpop.xlane.xlu0 %520
        %522 = vadd.xlane.f32.xlu0 %v441
        %v523 = vpop.xlane.xlu0 %522
        %524 = vadd.xlane.f32.xlu0 %v442
        %v525 = vpop.xlane.xlu0 %524
        %526 = vadd.xlane.f32.xlu0 %v443
        %v527 = vpop.xlane.xlu0 %526
        %528 = vadd.xlane.f32.xlu0 %v444
        %v529 = vpop.xlane.xlu0 %528
        %530 = vadd.xlane.f32.xlu0 %v445
        %v531 = vpop.xlane.xlu0 %530
        %532 = vadd.xlane.f32.xlu0 %v446
        %v533 = vpop.xlane.xlu0 %532
        %534 = vadd.xlane.f32.xlu0 %v447
        %v535 = vpop.xlane.xlu0 %534
        %536 = vadd.xlane.f32.xlu0 %v448
        %v537 = vpop.xlane.xlu0 %536
        %538 = vadd.xlane.f32.xlu0 %v449
        %v539 = vpop.xlane.xlu0 %538
        %540 = vadd.xlane.f32.xlu0 %v450
        %v541 = vpop.xlane.xlu0 %540
        %542 = vadd.xlane.f32.xlu0 %v451
        %v543 = vpop.xlane.xlu0 %542
        %544 = vadd.xlane.f32.xlu0 %v452
        %v545 = vpop.xlane.xlu0 %544
        %546 = vadd.xlane.f32.xlu0 %v453
        %v547 = vpop.xlane.xlu0 %546
        %548 = vadd.xlane.f32.xlu0 %v454
        %v549 = vpop.xlane.xlu0 %548
        %550 = vadd.xlane.f32.xlu0 %v455
        %v551 = vpop.xlane.xlu0 %550
        %552 = vadd.xlane.f32.xlu0 %v456
        %v553 = vpop.xlane.xlu0 %552
        %554 = vadd.xlane.f32.xlu0 %v457
        %v555 = vpop.xlane.xlu0 %554
        %556 = vadd.xlane.f32.xlu0 %v458
        %v557 = vpop.xlane.xlu0 %556
        %558 = vadd.xlane.f32.xlu0 %v459
        %v559 = vpop.xlane.xlu0 %558
        %560 = vadd.xlane.f32.xlu0 %v460
        %v561 = vpop.xlane.xlu0 %560
        %562 = vadd.xlane.f32.xlu0 %v461
        %v563 = vpop.xlane.xlu0 %562
        %564 = vadd.xlane.f32.xlu0 %v462
        %v565 = vpop.xlane.xlu0 %564
        %566 = vadd.xlane.f32.xlu0 %v463
        %v567 = vpop.xlane.xlu0 %566
        %568 = vadd.xlane.f32.xlu0 %v464
        %v569 = vpop.xlane.xlu0 %568
        %570 = vadd.xlane.f32.xlu0 %v465
        %v571 = vpop.xlane.xlu0 %570
        %572 = vadd.xlane.f32.xlu0 %v466
        %v573 = vpop.xlane.xlu0 %572
        %574 = vadd.xlane.f32.xlu0 %v467
        %v575 = vpop.xlane.xlu0 %574
        %576 = vadd.xlane.f32.xlu0 %v468
        %v577 = vpop.xlane.xlu0 %576
        %578 = vadd.xlane.f32.xlu0 %v469
        %v579 = vpop.xlane.xlu0 %578
        %580 = vadd.xlane.f32.xlu0 %v470
        %v581 = vpop.xlane.xlu0 %580
        %582 = vadd.xlane.f32.xlu0 %v471
        %v583 = vpop.xlane.xlu0 %582
        %584 = vadd.xlane.f32.xlu0 %v472
        %v585 = vpop.xlane.xlu0 %584
        %586 = vadd.xlane.f32.xlu0 %v473
        %v587 = vpop.xlane.xlu0 %586
        %588 = vadd.xlane.f32.xlu0 %v474
        %v589 = vpop.xlane.xlu0 %588
        %590 = vadd.xlane.f32.xlu0 %v475
        %v591 = vpop.xlane.xlu0 %590
        %592 = vadd.xlane.f32.xlu0 %v476
        %v593 = vpop.xlane.xlu0 %592
        %594 = vadd.xlane.f32.xlu0 %v477
        %v595 = vpop.xlane.xlu0 %594
        %596 = vadd.xlane.f32.xlu0 %v478
        %v597 = vpop.xlane.xlu0 %596
        %598 = vadd.xlane.f32.xlu0 %v479
        %v599 = vpop.xlane.xlu0 %598
        %600 = vadd.xlane.f32.xlu0 %v480
        %v601 = vpop.xlane.xlu0 %600
        %602 = vadd.xlane.f32.xlu0 %v481
        %v603 = vpop.xlane.xlu0 %602
        %604 = vadd.xlane.f32.xlu0 %v482
        %v605 = vpop.xlane.xlu0 %604
        %606 = vadd.xlane.f32.xlu0 %v483
        %v607 = vpop.xlane.xlu0 %606
        %608 = vadd.xlane.f32.xlu0 %v484
        %v609 = vpop.xlane.xlu0 %608
        %610 = vadd.xlane.f32.xlu0 %v485
        %v611 = vpop.xlane.xlu0 %610
        %612 = vadd.xlane.f32.xlu0 %v486
        %v613 = vpop.xlane.xlu0 %612
        %614 = vadd.xlane.f32.xlu0 %v487
        %v615 = vpop.xlane.xlu0 %614
        %v616 = vstv %s418
        %v617 = vadd.f32 %v489, %v616
        %v618 = vadd.f32 %v491, %v616
        %v619 = vadd.f32 %v493, %v616
        %v620 = vadd.f32 %v495, %v616
        %v621 = vadd.f32 %v497, %v616
        %v622 = vadd.f32 %v499, %v616
        %v623 = vadd.f32 %v501, %v616
        %v624 = vadd.f32 %v503, %v616
        %v625 = vadd.f32 %v505, %v616
        %v626 = vadd.f32 %v507, %v616
        %v627 = vadd.f32 %v509, %v616
        %v628 = vadd.f32 %v511, %v616
        %v629 = vadd.f32 %v513, %v616
        %v630 = vadd.f32 %v515, %v616
        %v631 = vadd.f32 %v517, %v616
        %v632 = vadd.f32 %v519, %v616
        %v633 = vadd.f32 %v521, %v616
        %v634 = vadd.f32 %v523, %v616
        %v635 = vadd.f32 %v525, %v616
        %v636 = vadd.f32 %v527, %v616
        %v637 = vadd.f32 %v529, %v616
        %v638 = vadd.f32 %v531, %v616
        %v639 = vadd.f32 %v533, %v616
        %v640 = vadd.f32 %v535, %v616
        %v641 = vadd.f32 %v537, %v616
        %v642 = vadd.f32 %v539, %v616
        %v643 = vadd.f32 %v541, %v616
        %v644 = vadd.f32 %v543, %v616
        %v645 = vadd.f32 %v545, %v616
        %v646 = vadd.f32 %v547, %v616
        %v647 = vadd.f32 %v549, %v616
        %v648 = vadd.f32 %v551, %v616
        %v649 = vadd.f32 %v553, %v616
        %v650 = vadd.f32 %v555, %v616
        %v651 = vadd.f32 %v557, %v616
        %v652 = vadd.f32 %v559, %v616
        %v653 = vadd.f32 %v561, %v616
        %v654 = vadd.f32 %v563, %v616
        %v655 = vadd.f32 %v565, %v616
        %v656 = vadd.f32 %v567, %v616
        %v657 = vadd.f32 %v569, %v616
        %v658 = vadd.f32 %v571, %v616
        %v659 = vadd.f32 %v573, %v616
        %v660 = vadd.f32 %v575, %v616
        %v661 = vadd.f32 %v577, %v616
        %v662 = vadd.f32 %v579, %v616
        %v663 = vadd.f32 %v581, %v616
        %v664 = vadd.f32 %v583, %v616
        %v665 = vadd.f32 %v585, %v616
        %v666 = vadd.f32 %v587, %v616
        %v667 = vadd.f32 %v589, %v616
        %v668 = vadd.f32 %v591, %v616
        %v669 = vadd.f32 %v593, %v616
        %v670 = vadd.f32 %v595, %v616
        %v671 = vadd.f32 %v597, %v616
        %v672 = vadd.f32 %v599, %v616
        %v673 = vadd.f32 %v601, %v616
        %v674 = vadd.f32 %v603, %v616
        %v675 = vadd.f32 %v605, %v616
        %v676 = vadd.f32 %v607, %v616
        %v677 = vadd.f32 %v609, %v616
        %v678 = vadd.f32 %v611, %v616
        %v679 = vadd.f32 %v613, %v616
        %v680 = vadd.f32 %v615, %v616
        %v681 = vxor.u32 %v617, 2147483648
        %v682 = vxor.u32 %v618, 2147483648
        %v683 = vxor.u32 %v619, 2147483648
        %v684 = vxor.u32 %v620, 2147483648
        %v685 = vxor.u32 %v621, 2147483648
        %v686 = vxor.u32 %v622, 2147483648
        %v687 = vxor.u32 %v623, 2147483648
        %v688 = vxor.u32 %v624, 2147483648
        %v689 = vxor.u32 %v625, 2147483648
        %v690 = vxor.u32 %v626, 2147483648
        %v691 = vxor.u32 %v627, 2147483648
        %v692 = vxor.u32 %v628, 2147483648
        %v693 = vxor.u32 %v629, 2147483648
        %v694 = vxor.u32 %v630, 2147483648
        %v695 = vxor.u32 %v631, 2147483648
        %v696 = vxor.u32 %v632, 2147483648
        %v697 = vxor.u32 %v633, 2147483648
        %v698 = vxor.u32 %v634, 2147483648
        %v699 = vxor.u32 %v635, 2147483648
        %v700 = vxor.u32 %v636, 2147483648
        %v701 = vxor.u32 %v637, 2147483648
        %v702 = vxor.u32 %v638, 2147483648
        %v703 = vxor.u32 %v639, 2147483648
        %v704 = vxor.u32 %v640, 2147483648
        %v705 = vxor.u32 %v641, 2147483648
        %v706 = vxor.u32 %v642, 2147483648
        %v707 = vxor.u32 %v643, 2147483648
        %v708 = vxor.u32 %v644, 2147483648
        %v709 = vxor.u32 %v645, 2147483648
        %v710 = vxor.u32 %v646, 2147483648
        %v711 = vxor.u32 %v647, 2147483648
        %v712 = vxor.u32 %v648, 2147483648
        %v713 = vxor.u32 %v649, 2147483648
        %v714 = vxor.u32 %v650, 2147483648
        %v715 = vxor.u32 %v651, 2147483648
        %v716 = vxor.u32 %v652, 2147483648
        %v717 = vxor.u32 %v653, 2147483648
        %v718 = vxor.u32 %v654, 2147483648
        %v719 = vxor.u32 %v655, 2147483648
        %v720 = vxor.u32 %v656, 2147483648
        %v721 = vxor.u32 %v657, 2147483648
        %v722 = vxor.u32 %v658, 2147483648
        %v723 = vxor.u32 %v659, 2147483648
        %v724 = vxor.u32 %v660, 2147483648
        %v725 = vxor.u32 %v661, 2147483648
        %v726 = vxor.u32 %v662, 2147483648
        %v727 = vxor.u32 %v663, 2147483648
        %v728 = vxor.u32 %v664, 2147483648
        %v729 = vxor.u32 %v665, 2147483648
        %v730 = vxor.u32 %v666, 2147483648
        %v731 = vxor.u32 %v667, 2147483648
        %v732 = vxor.u32 %v668, 2147483648
        %v733 = vxor.u32 %v669, 2147483648
        %v734 = vxor.u32 %v670, 2147483648
        %v735 = vxor.u32 %v671, 2147483648
        %v736 = vxor.u32 %v672, 2147483648
        %v737 = vxor.u32 %v673, 2147483648
        %v738 = vxor.u32 %v674, 2147483648
        %v739 = vxor.u32 %v675, 2147483648
        %v740 = vxor.u32 %v676, 2147483648
        %v741 = vxor.u32 %v677, 2147483648
        %v742 = vxor.u32 %v678, 2147483648
        %v743 = vxor.u32 %v679, 2147483648
        %v744 = vxor.u32 %v680, 2147483648
        %v745 = vmul.f32 %v681, 1.442695
        %v746 = vpow.pop %v745
        %v747 = vmul.f32 %v682, 1.442695
        %v748 = vpow.pop %v747
        %v749 = vmul.f32 %v683, 1.442695
        %v750 = vpow.pop %v749
        %v751 = vmul.f32 %v684, 1.442695
        %v752 = vpow.pop %v751
        %v753 = vmul.f32 %v685, 1.442695
        %v754 = vpow.pop %v753
        %v755 = vmul.f32 %v686, 1.442695
        %v756 = vpow.pop %v755
        %v757 = vmul.f32 %v687, 1.442695
        %v758 = vpow.pop %v757
        %v759 = vmul.f32 %v688, 1.442695
        %v760 = vpow.pop %v759
        %v761 = vmul.f32 %v689, 1.442695
        %v762 = vpow.pop %v761
        %v763 = vmul.f32 %v690, 1.442695
        %v764 = vpow.pop %v763
        %v765 = vmul.f32 %v691, 1.442695
        %v766 = vpow.pop %v765
        %v767 = vmul.f32 %v692, 1.442695
        %v768 = vpow.pop %v767
        %v769 = vmul.f32 %v693, 1.442695
        %v770 = vpow.pop %v769
        %v771 = vmul.f32 %v694, 1.442695
        %v772 = vpow.pop %v771
        %v773 = vmul.f32 %v695, 1.442695
        %v774 = vpow.pop %v773
        %v775 = vmul.f32 %v696, 1.442695
        %v776 = vpow.pop %v775
        %v777 = vmul.f32 %v697, 1.442695
        %v778 = vpow.pop %v777
        %v779 = vmul.f32 %v698, 1.442695
        %v780 = vpow.pop %v779
        %v781 = vmul.f32 %v699, 1.442695
        %v782 = vpow.pop %v781
        %v783 = vmul.f32 %v700, 1.442695
        %v784 = vpow.pop %v783
        %v785 = vmul.f32 %v701, 1.442695
        %v786 = vpow.pop %v785
        %v787 = vmul.f32 %v702, 1.442695
        %v788 = vpow.pop %v787
        %v789 = vmul.f32 %v703, 1.442695
        %v790 = vpow.pop %v789
        %v791 = vmul.f32 %v704, 1.442695
        %v792 = vpow.pop %v791
        %v793 = vmul.f32 %v705, 1.442695
        %v794 = vpow.pop %v793
        %v795 = vmul.f32 %v706, 1.442695
        %v796 = vpow.pop %v795
        %v797 = vmul.f32 %v707, 1.442695
        %v798 = vpow.pop %v797
        %v799 = vmul.f32 %v708, 1.442695
        %v800 = vpow.pop %v799
        %v801 = vmul.f32 %v709, 1.442695
        %v802 = vpow.pop %v801
        %v803 = vmul.f32 %v710, 1.442695
        %v804 = vpow.pop %v803
        %v805 = vmul.f32 %v711, 1.442695
        %v806 = vpow.pop %v805
        %v807 = vmul.f32 %v712, 1.442695
        %v808 = vpow.pop %v807
        %v809 = vmul.f32 %v713, 1.442695
        %v810 = vpow.pop %v809
        %v811 = vmul.f32 %v714, 1.442695
        %v812 = vpow.pop %v811
        %v813 = vmul.f32 %v715, 1.442695
        %v814 = vpow.pop %v813
        %v815 = vmul.f32 %v716, 1.442695
        %v816 = vpow.pop %v815
        %v817 = vmul.f32 %v717, 1.442695
        %v818 = vpow.pop %v817
        %v819 = vmul.f32 %v718, 1.442695
        %v820 = vpow.pop %v819
        %v821 = vmul.f32 %v719, 1.442695
        %v822 = vpow.pop %v821
        %v823 = vmul.f32 %v720, 1.442695
        %v824 = vpow.pop %v823
        %v825 = vmul.f32 %v721, 1.442695
        %v826 = vpow.pop %v825
        %v827 = vmul.f32 %v722, 1.442695
        %v828 = vpow.pop %v827
        %v829 = vmul.f32 %v723, 1.442695
        %v830 = vpow.pop %v829
        %v831 = vmul.f32 %v724, 1.442695
        %v832 = vpow.pop %v831
        %v833 = vmul.f32 %v725, 1.442695
        %v834 = vpow.pop %v833
        %v835 = vmul.f32 %v726, 1.442695
        %v836 = vpow.pop %v835
        %v837 = vmul.f32 %v727, 1.442695
        %v838 = vpow.pop %v837
        %v839 = vmul.f32 %v728, 1.442695
        %v840 = vpow.pop %v839
        %v841 = vmul.f32 %v729, 1.442695
        %v842 = vpow.pop %v841
        %v843 = vmul.f32 %v730, 1.442695
        %v844 = vpow.pop %v843
        %v845 = vmul.f32 %v731, 1.442695
        %v846 = vpow.pop %v845
        %v847 = vmul.f32 %v732, 1.442695
        %v848 = vpow.pop %v847
        %v849 = vmul.f32 %v733, 1.442695
        %v850 = vpow.pop %v849
        %v851 = vmul.f32 %v734, 1.442695
        %v852 = vpow.pop %v851
        %v853 = vmul.f32 %v735, 1.442695
        %v854 = vpow.pop %v853
        %v855 = vmul.f32 %v736, 1.442695
        %v856 = vpow.pop %v855
        %v857 = vmul.f32 %v737, 1.442695
        %v858 = vpow.pop %v857
        %v859 = vmul.f32 %v738, 1.442695
        %v860 = vpow.pop %v859
        %v861 = vmul.f32 %v739, 1.442695
        %v862 = vpow.pop %v861
        %v863 = vmul.f32 %v740, 1.442695
        %v864 = vpow.pop %v863
        %v865 = vmul.f32 %v741, 1.442695
        %v866 = vpow.pop %v865
        %v867 = vmul.f32 %v742, 1.442695
        %v868 = vpow.pop %v867
        %v869 = vmul.f32 %v743, 1.442695
        %v870 = vpow.pop %v869
        %v871 = vmul.f32 %v744, 1.442695
        %v872 = vpow.pop %v871
        %v873 = vadd.f32 %v746, 1.0
        %v874 = vadd.f32 %v748, 1.0
        %v875 = vadd.f32 %v750, 1.0
        %v876 = vadd.f32 %v752, 1.0
        %v877 = vadd.f32 %v754, 1.0
        %v878 = vadd.f32 %v756, 1.0
        %v879 = vadd.f32 %v758, 1.0
        %v880 = vadd.f32 %v760, 1.0
        %v881 = vadd.f32 %v762, 1.0
        %v882 = vadd.f32 %v764, 1.0
        %v883 = vadd.f32 %v766, 1.0
        %v884 = vadd.f32 %v768, 1.0
        %v885 = vadd.f32 %v770, 1.0
        %v886 = vadd.f32 %v772, 1.0
        %v887 = vadd.f32 %v774, 1.0
        %v888 = vadd.f32 %v776, 1.0
        %v889 = vadd.f32 %v778, 1.0
        %v890 = vadd.f32 %v780, 1.0
        %v891 = vadd.f32 %v782, 1.0
        %v892 = vadd.f32 %v784, 1.0
        %v893 = vadd.f32 %v786, 1.0
        %v894 = vadd.f32 %v788, 1.0
        %v895 = vadd.f32 %v790, 1.0
        %v896 = vadd.f32 %v792, 1.0
        %v897 = vadd.f32 %v794, 1.0
        %v898 = vadd.f32 %v796, 1.0
        %v899 = vadd.f32 %v798, 1.0
        %v900 = vadd.f32 %v800, 1.0
        %v901 = vadd.f32 %v802, 1.0
        %v902 = vadd.f32 %v804, 1.0
        %v903 = vadd.f32 %v806, 1.0
        %v904 = vadd.f32 %v808, 1.0
        %v905 = vadd.f32 %v810, 1.0
        %v906 = vadd.f32 %v812, 1.0
        %v907 = vadd.f32 %v814, 1.0
        %v908 = vadd.f32 %v816, 1.0
        %v909 = vadd.f32 %v818, 1.0
        %v910 = vadd.f32 %v820, 1.0
        %v911 = vadd.f32 %v822, 1.0
        %v912 = vadd.f32 %v824, 1.0
        %v913 = vadd.f32 %v826, 1.0
        %v914 = vadd.f32 %v828, 1.0
        %v915 = vadd.f32 %v830, 1.0
        %v916 = vadd.f32 %v832, 1.0
        %v917 = vadd.f32 %v834, 1.0
        %v918 = vadd.f32 %v836, 1.0
        %v919 = vadd.f32 %v838, 1.0
        %v920 = vadd.f32 %v840, 1.0
        %v921 = vadd.f32 %v842, 1.0
        %v922 = vadd.f32 %v844, 1.0
        %v923 = vadd.f32 %v846, 1.0
        %v924 = vadd.f32 %v848, 1.0
        %v925 = vadd.f32 %v850, 1.0
        %v926 = vadd.f32 %v852, 1.0
        %v927 = vadd.f32 %v854, 1.0
        %v928 = vadd.f32 %v856, 1.0
        %v929 = vadd.f32 %v858, 1.0
        %v930 = vadd.f32 %v860, 1.0
        %v931 = vadd.f32 %v862, 1.0
        %v932 = vadd.f32 %v864, 1.0
        %v933 = vadd.f32 %v866, 1.0
        %v934 = vadd.f32 %v868, 1.0
        %v935 = vadd.f32 %v870, 1.0
        %v936 = vadd.f32 %v872, 1.0
        %v937 = vrcp.pop %v873
        %v938 = vmul.f32 1.0, %v937
        %v939 = vrcp.pop %v874
        %v940 = vmul.f32 1.0, %v939
        %v941 = vrcp.pop %v875
        %v942 = vmul.f32 1.0, %v941
        %v943 = vrcp.pop %v876
        %v944 = vmul.f32 1.0, %v943
        %v945 = vrcp.pop %v877
        %v946 = vmul.f32 1.0, %v945
        %v947 = vrcp.pop %v878
        %v948 = vmul.f32 1.0, %v947
        %v949 = vrcp.pop %v879
        %v950 = vmul.f32 1.0, %v949
        %v951 = vrcp.pop %v880
        %v952 = vmul.f32 1.0, %v951
        %v953 = vrcp.pop %v881
        %v954 = vmul.f32 1.0, %v953
        %v955 = vrcp.pop %v882
        %v956 = vmul.f32 1.0, %v955
        %v957 = vrcp.pop %v883
        %v958 = vmul.f32 1.0, %v957
        %v959 = vrcp.pop %v884
        %v960 = vmul.f32 1.0, %v959
        %v961 = vrcp.pop %v885
        %v962 = vmul.f32 1.0, %v961
        %v963 = vrcp.pop %v886
        %v964 = vmul.f32 1.0, %v963
        %v965 = vrcp.pop %v887
        %v966 = vmul.f32 1.0, %v965
        %v967 = vrcp.pop %v888
        %v968 = vmul.f32 1.0, %v967
        %v969 = vrcp.pop %v889
        %v970 = vmul.f32 1.0, %v969
        %v971 = vrcp.pop %v890
        %v972 = vmul.f32 1.0, %v971
        %v973 = vrcp.pop %v891
        %v974 = vmul.f32 1.0, %v973
        %v975 = vrcp.pop %v892
        %v976 = vmul.f32 1.0, %v975
        %v977 = vrcp.pop %v893
        %v978 = vmul.f32 1.0, %v977
        %v979 = vrcp.pop %v894
        %v980 = vmul.f32 1.0, %v979
        %v981 = vrcp.pop %v895
        %v982 = vmul.f32 1.0, %v981
        %v983 = vrcp.pop %v896
        %v984 = vmul.f32 1.0, %v983
        %v985 = vrcp.pop %v897
        %v986 = vmul.f32 1.0, %v985
        %v987 = vrcp.pop %v898
        %v988 = vmul.f32 1.0, %v987
        %v989 = vrcp.pop %v899
        %v990 = vmul.f32 1.0, %v989
        %v991 = vrcp.pop %v900
        %v992 = vmul.f32 1.0, %v991
        %v993 = vrcp.pop %v901
        %v994 = vmul.f32 1.0, %v993
        %v995 = vrcp.pop %v902
        %v996 = vmul.f32 1.0, %v995
        %v997 = vrcp.pop %v903
        %v998 = vmul.f32 1.0, %v997
        %v999 = vrcp.pop %v904
        %v1000 = vmul.f32 1.0, %v999
        %v1001 = vrcp.pop %v905
        %v1002 = vmul.f32 1.0, %v1001
        %v1003 = vrcp.pop %v906
        %v1004 = vmul.f32 1.0, %v1003
        %v1005 = vrcp.pop %v907
        %v1006 = vmul.f32 1.0, %v1005
        %v1007 = vrcp.pop %v908
        %v1008 = vmul.f32 1.0, %v1007
        %v1009 = vrcp.pop %v909
        %v1010 = vmul.f32 1.0, %v1009
        %v1011 = vrcp.pop %v910
        %v1012 = vmul.f32 1.0, %v1011
        %v1013 = vrcp.pop %v911
        %v1014 = vmul.f32 1.0, %v1013
        %v1015 = vrcp.pop %v912
        %v1016 = vmul.f32 1.0, %v1015
        %v1017 = vrcp.pop %v913
        %v1018 = vmul.f32 1.0, %v1017
        %v1019 = vrcp.pop %v914
        %v1020 = vmul.f32 1.0, %v1019
        %v1021 = vrcp.pop %v915
        %v1022 = vmul.f32 1.0, %v1021
        %v1023 = vrcp.pop %v916
        %v1024 = vmul.f32 1.0, %v1023
        %v1025 = vrcp.pop %v917
        %v1026 = vmul.f32 1.0, %v1025
        %v1027 = vrcp.pop %v918
        %v1028 = vmul.f32 1.0, %v1027
        %v1029 = vrcp.pop %v919
        %v1030 = vmul.f32 1.0, %v1029
        %v1031 = vrcp.pop %v920
        %v1032 = vmul.f32 1.0, %v1031
        %v1033 = vrcp.pop %v921
        %v1034 = vmul.f32 1.0, %v1033
        %v1035 = vrcp.pop %v922
        %v1036 = vmul.f32 1.0, %v1035
        %v1037 = vrcp.pop %v923
        %v1038 = vmul.f32 1.0, %v1037
        %v1039 = vrcp.pop %v924
        %v1040 = vmul.f32 1.0, %v1039
        %v1041 = vrcp.pop %v925
        %v1042 = vmul.f32 1.0, %v1041
        %v1043 = vrcp.pop %v926
        %v1044 = vmul.f32 1.0, %v1043
        %v1045 = vrcp.pop %v927
        %v1046 = vmul.f32 1.0, %v1045
        %v1047 = vrcp.pop %v928
        %v1048 = vmul.f32 1.0, %v1047
        %v1049 = vrcp.pop %v929
        %v1050 = vmul.f32 1.0, %v1049
        %v1051 = vrcp.pop %v930
        %v1052 = vmul.f32 1.0, %v1051
        %v1053 = vrcp.pop %v931
        %v1054 = vmul.f32 1.0, %v1053
        %v1055 = vrcp.pop %v932
        %v1056 = vmul.f32 1.0, %v1055
        %v1057 = vrcp.pop %v933
        %v1058 = vmul.f32 1.0, %v1057
        %v1059 = vrcp.pop %v934
        %v1060 = vmul.f32 1.0, %v1059
        %v1061 = vrcp.pop %v935
        %v1062 = vmul.f32 1.0, %v1061
        %v1063 = vrcp.pop %v936
        %v1064 = vmul.f32 1.0, %v1063
        %vm1065 = vcmp.gt.f32.partialorder %v938, 0.005
        %vm1066 = vcmp.gt.f32.partialorder %v940, 0.005
        %vm1067 = vcmp.gt.f32.partialorder %v942, 0.005
        %vm1068 = vcmp.gt.f32.partialorder %v944, 0.005
        %vm1069 = vcmp.gt.f32.partialorder %v946, 0.005
        %vm1070 = vcmp.gt.f32.partialorder %v948, 0.005
        %vm1071 = vcmp.gt.f32.partialorder %v950, 0.005
        %vm1072 = vcmp.gt.f32.partialorder %v952, 0.005
        %vm1073 = vcmp.gt.f32.partialorder %v954, 0.005
        %vm1074 = vcmp.gt.f32.partialorder %v956, 0.005
        %vm1075 = vcmp.gt.f32.partialorder %v958, 0.005
        %vm1076 = vcmp.gt.f32.partialorder %v960, 0.005
        %vm1077 = vcmp.gt.f32.partialorder %v962, 0.005
        %vm1078 = vcmp.gt.f32.partialorder %v964, 0.005
        %vm1079 = vcmp.gt.f32.partialorder %v966, 0.005
        %vm1080 = vcmp.gt.f32.partialorder %v968, 0.005
        %vm1081 = vcmp.gt.f32.partialorder %v970, 0.005
        %vm1082 = vcmp.gt.f32.partialorder %v972, 0.005
        %vm1083 = vcmp.gt.f32.partialorder %v974, 0.005
        %vm1084 = vcmp.gt.f32.partialorder %v976, 0.005
        %vm1085 = vcmp.gt.f32.partialorder %v978, 0.005
        %vm1086 = vcmp.gt.f32.partialorder %v980, 0.005
        %vm1087 = vcmp.gt.f32.partialorder %v982, 0.005
        %vm1088 = vcmp.gt.f32.partialorder %v984, 0.005
        %vm1089 = vcmp.gt.f32.partialorder %v986, 0.005
        %vm1090 = vcmp.gt.f32.partialorder %v988, 0.005
        %vm1091 = vcmp.gt.f32.partialorder %v990, 0.005
        %vm1092 = vcmp.gt.f32.partialorder %v992, 0.005
        %vm1093 = vcmp.gt.f32.partialorder %v994, 0.005
        %vm1094 = vcmp.gt.f32.partialorder %v996, 0.005
        %vm1095 = vcmp.gt.f32.partialorder %v998, 0.005
        %vm1096 = vcmp.gt.f32.partialorder %v1000, 0.005
        %vm1097 = vcmp.gt.f32.partialorder %v1002, 0.005
        %vm1098 = vcmp.gt.f32.partialorder %v1004, 0.005
        %vm1099 = vcmp.gt.f32.partialorder %v1006, 0.005
        %vm1100 = vcmp.gt.f32.partialorder %v1008, 0.005
        %vm1101 = vcmp.gt.f32.partialorder %v1010, 0.005
        %vm1102 = vcmp.gt.f32.partialorder %v1012, 0.005
        %vm1103 = vcmp.gt.f32.partialorder %v1014, 0.005
        %vm1104 = vcmp.gt.f32.partialorder %v1016, 0.005
        %vm1105 = vcmp.gt.f32.partialorder %v1018, 0.005
        %vm1106 = vcmp.gt.f32.partialorder %v1020, 0.005
        %vm1107 = vcmp.gt.f32.partialorder %v1022, 0.005
        %vm1108 = vcmp.gt.f32.partialorder %v1024, 0.005
        %vm1109 = vcmp.gt.f32.partialorder %v1026, 0.005
        %vm1110 = vcmp.gt.f32.partialorder %v1028, 0.005
        %vm1111 = vcmp.gt.f32.partialorder %v1030, 0.005
        %vm1112 = vcmp.gt.f32.partialorder %v1032, 0.005
        %vm1113 = vcmp.gt.f32.partialorder %v1034, 0.005
        %vm1114 = vcmp.gt.f32.partialorder %v1036, 0.005
        %vm1115 = vcmp.gt.f32.partialorder %v1038, 0.005
        %vm1116 = vcmp.gt.f32.partialorder %v1040, 0.005
        %vm1117 = vcmp.gt.f32.partialorder %v1042, 0.005
        %vm1118 = vcmp.gt.f32.partialorder %v1044, 0.005
        %vm1119 = vcmp.gt.f32.partialorder %v1046, 0.005
        %vm1120 = vcmp.gt.f32.partialorder %v1048, 0.005
        %vm1121 = vcmp.gt.f32.partialorder %v1050, 0.005
        %vm1122 = vcmp.gt.f32.partialorder %v1052, 0.005
        %vm1123 = vcmp.gt.f32.partialorder %v1054, 0.005
        %vm1124 = vcmp.gt.f32.partialorder %v1056, 0.005
        %vm1125 = vcmp.gt.f32.partialorder %v1058, 0.005
        %vm1126 = vcmp.gt.f32.partialorder %v1060, 0.005
        %vm1127 = vcmp.gt.f32.partialorder %v1062, 0.005
        %vm1128 = vcmp.gt.f32.partialorder %v1064, 0.005
        %v1129 = vsel %vm1065, 1, 0
        %v1130 = vsel %vm1066, 1, 0
        %v1131 = vsel %vm1067, 1, 0
        %v1132 = vsel %vm1068, 1, 0
        %v1133 = vsel %vm1069, 1, 0
        %v1134 = vsel %vm1070, 1, 0
        %v1135 = vsel %vm1071, 1, 0
        %v1136 = vsel %vm1072, 1, 0
        %v1137 = vsel %vm1073, 1, 0
        %v1138 = vsel %vm1074, 1, 0
        %v1139 = vsel %vm1075, 1, 0
        %v1140 = vsel %vm1076, 1, 0
        %v1141 = vsel %vm1077, 1, 0
        %v1142 = vsel %vm1078, 1, 0
        %v1143 = vsel %vm1079, 1, 0
        %v1144 = vsel %vm1080, 1, 0
        %v1145 = vsel %vm1081, 1, 0
        %v1146 = vsel %vm1082, 1, 0
        %v1147 = vsel %vm1083, 1, 0
        %v1148 = vsel %vm1084, 1, 0
        %v1149 = vsel %vm1085, 1, 0
        %v1150 = vsel %vm1086, 1, 0
        %v1151 = vsel %vm1087, 1, 0
        %v1152 = vsel %vm1088, 1, 0
        %v1153 = vsel %vm1089, 1, 0
        %v1154 = vsel %vm1090, 1, 0
        %v1155 = vsel %vm1091, 1, 0
        %v1156 = vsel %vm1092, 1, 0
        %v1157 = vsel %vm1093, 1, 0
        %v1158 = vsel %vm1094, 1, 0
        %v1159 = vsel %vm1095, 1, 0
        %v1160 = vsel %vm1096, 1, 0
        %v1161 = vsel %vm1097, 1, 0
        %v1162 = vsel %vm1098, 1, 0
        %v1163 = vsel %vm1099, 1, 0
        %v1164 = vsel %vm1100, 1, 0
        %v1165 = vsel %vm1101, 1, 0
        %v1166 = vsel %vm1102, 1, 0
        %v1167 = vsel %vm1103, 1, 0
        %v1168 = vsel %vm1104, 1, 0
        %v1169 = vsel %vm1105, 1, 0
        %v1170 = vsel %vm1106, 1, 0
        %v1171 = vsel %vm1107, 1, 0
        %v1172 = vsel %vm1108, 1, 0
        %v1173 = vsel %vm1109, 1, 0
        %v1174 = vsel %vm1110, 1, 0
        %v1175 = vsel %vm1111, 1, 0
        %v1176 = vsel %vm1112, 1, 0
        %v1177 = vsel %vm1113, 1, 0
        %v1178 = vsel %vm1114, 1, 0
        %v1179 = vsel %vm1115, 1, 0
        %v1180 = vsel %vm1116, 1, 0
        %v1181 = vsel %vm1117, 1, 0
        %v1182 = vsel %vm1118, 1, 0
        %v1183 = vsel %vm1119, 1, 0
        %v1184 = vsel %vm1120, 1, 0
        %v1185 = vsel %vm1121, 1, 0
        %v1186 = vsel %vm1122, 1, 0
        %v1187 = vsel %vm1123, 1, 0
        %v1188 = vsel %vm1124, 1, 0
        %v1189 = vsel %vm1125, 1, 0
        %v1190 = vsel %vm1126, 1, 0
        %v1191 = vsel %vm1127, 1, 0
        %v1192 = vsel %vm1128, 1, 0
        %v1193 = vcvt.s32.f32 %v1129
        %v1194 = vcvt.s32.f32 %v1130
        %v1195 = vcvt.s32.f32 %v1131
        %v1196 = vcvt.s32.f32 %v1132
        %v1197 = vcvt.s32.f32 %v1133
        %v1198 = vcvt.s32.f32 %v1134
        %v1199 = vcvt.s32.f32 %v1135
        %v1200 = vcvt.s32.f32 %v1136
        %v1201 = vcvt.s32.f32 %v1137
        %v1202 = vcvt.s32.f32 %v1138
        %v1203 = vcvt.s32.f32 %v1139
        %v1204 = vcvt.s32.f32 %v1140
        %v1205 = vcvt.s32.f32 %v1141
        %v1206 = vcvt.s32.f32 %v1142
        %v1207 = vcvt.s32.f32 %v1143
        %v1208 = vcvt.s32.f32 %v1144
        %v1209 = vcvt.s32.f32 %v1145
        %v1210 = vcvt.s32.f32 %v1146
        %v1211 = vcvt.s32.f32 %v1147
        %v1212 = vcvt.s32.f32 %v1148
        %v1213 = vcvt.s32.f32 %v1149
        %v1214 = vcvt.s32.f32 %v1150
        %v1215 = vcvt.s32.f32 %v1151
        %v1216 = vcvt.s32.f32 %v1152
        %v1217 = vcvt.s32.f32 %v1153
        %v1218 = vcvt.s32.f32 %v1154
        %v1219 = vcvt.s32.f32 %v1155
        %v1220 = vcvt.s32.f32 %v1156
        %v1221 = vcvt.s32.f32 %v1157
        %v1222 = vcvt.s32.f32 %v1158
        %v1223 = vcvt.s32.f32 %v1159
        %v1224 = vcvt.s32.f32 %v1160
        %v1225 = vcvt.s32.f32 %v1161
        %v1226 = vcvt.s32.f32 %v1162
        %v1227 = vcvt.s32.f32 %v1163
        %v1228 = vcvt.s32.f32 %v1164
        %v1229 = vcvt.s32.f32 %v1165
        %v1230 = vcvt.s32.f32 %v1166
        %v1231 = vcvt.s32.f32 %v1167
        %v1232 = vcvt.s32.f32 %v1168
        %v1233 = vcvt.s32.f32 %v1169
        %v1234 = vcvt.s32.f32 %v1170
        %v1235 = vcvt.s32.f32 %v1171
        %v1236 = vcvt.s32.f32 %v1172
        %v1237 = vcvt.s32.f32 %v1173
        %v1238 = vcvt.s32.f32 %v1174
        %v1239 = vcvt.s32.f32 %v1175
        %v1240 = vcvt.s32.f32 %v1176
        %v1241 = vcvt.s32.f32 %v1177
        %v1242 = vcvt.s32.f32 %v1178
        %v1243 = vcvt.s32.f32 %v1179
        %v1244 = vcvt.s32.f32 %v1180
        %v1245 = vcvt.s32.f32 %v1181
        %v1246 = vcvt.s32.f32 %v1182
        %v1247 = vcvt.s32.f32 %v1183
        %v1248 = vcvt.s32.f32 %v1184
        %v1249 = vcvt.s32.f32 %v1185
        %v1250 = vcvt.s32.f32 %v1186
        %v1251 = vcvt.s32.f32 %v1187
        %v1252 = vcvt.s32.f32 %v1188
        %v1253 = vcvt.s32.f32 %v1189
        %v1254 = vcvt.s32.f32 %v1190
        %v1255 = vcvt.s32.f32 %v1191
        %v1256 = vcvt.s32.f32 %v1192
        %v1257 = vmul.f32 %v354, %v1193
        %v1258 = vmul.f32 %v355, %v1194
        %v1259 = vmul.f32 %v356, %v1195
        %v1260 = vmul.f32 %v357, %v1196
        %v1261 = vmul.f32 %v358, %v1197
        %v1262 = vmul.f32 %v359, %v1198
        %v1263 = vmul.f32 %v360, %v1199
        %v1264 = vmul.f32 %v361, %v1200
        %v1265 = vmul.f32 %v362, %v1201
        %v1266 = vmul.f32 %v363, %v1202
        %v1267 = vmul.f32 %v364, %v1203
        %v1268 = vmul.f32 %v365, %v1204
        %v1269 = vmul.f32 %v366, %v1205
        %v1270 = vmul.f32 %v367, %v1206
        %v1271 = vmul.f32 %v368, %v1207
        %v1272 = vmul.f32 %v369, %v1208
        %v1273 = vmul.f32 %v370, %v1209
        %v1274 = vmul.f32 %v371, %v1210
        %v1275 = vmul.f32 %v372, %v1211
        %v1276 = vmul.f32 %v373, %v1212
        %v1277 = vmul.f32 %v374, %v1213
        %v1278 = vmul.f32 %v375, %v1214
        %v1279 = vmul.f32 %v376, %v1215
        %v1280 = vmul.f32 %v377, %v1216
        %v1281 = vmul.f32 %v378, %v1217
        %v1282 = vmul.f32 %v379, %v1218
        %v1283 = vmul.f32 %v380, %v1219
        %v1284 = vmul.f32 %v381, %v1220
        %v1285 = vmul.f32 %v382, %v1221
        %v1286 = vmul.f32 %v383, %v1222
        %v1287 = vmul.f32 %v384, %v1223
        %v1288 = vmul.f32 %v385, %v1224
        %v1289 = vmul.f32 %v386, %v1225
        %v1290 = vmul.f32 %v387, %v1226
        %v1291 = vmul.f32 %v388, %v1227
        %v1292 = vmul.f32 %v389, %v1228
        %v1293 = vmul.f32 %v390, %v1229
        %v1294 = vmul.f32 %v391, %v1230
        %v1295 = vmul.f32 %v392, %v1231
        %v1296 = vmul.f32 %v393, %v1232
        %v1297 = vmul.f32 %v394, %v1233
        %v1298 = vmul.f32 %v395, %v1234
        %v1299 = vmul.f32 %v396, %v1235
        %v1300 = vmul.f32 %v397, %v1236
        %v1301 = vmul.f32 %v398, %v1237
        %v1302 = vmul.f32 %v399, %v1238
        %v1303 = vmul.f32 %v400, %v1239
        %v1304 = vmul.f32 %v401, %v1240
        %v1305 = vmul.f32 %v402, %v1241
        %v1306 = vmul.f32 %v403, %v1242
        %v1307 = vmul.f32 %v404, %v1243
        %v1308 = vmul.f32 %v405, %v1244
        %v1309 = vmul.f32 %v406, %v1245
        %v1310 = vmul.f32 %v407, %v1246
        %v1311 = vmul.f32 %v408, %v1247
        %v1312 = vmul.f32 %v409, %v1248
        %v1313 = vmul.f32 %v410, %v1249
        %v1314 = vmul.f32 %v411, %v1250
        %v1315 = vmul.f32 %v412, %v1251
        %v1316 = vmul.f32 %v413, %v1252
        %v1317 = vmul.f32 %v414, %v1253
        %v1318 = vmul.f32 %v415, %v1254
        %v1319 = vmul.f32 %v416, %v1255
        %v1320 = vmul.f32 %v417, %v1256
        %1321 = vst [vmem:[%s343] sm:$0xff] %v1257
        %1322 = vst [vmem:[%s343 + $0x8] sm:$0xff] %v1258
        %1323 = vst [vmem:[%s343 + $0x10] sm:$0xff] %v1259
        %1324 = vst [vmem:[%s343 + $0x18] sm:$0xff] %v1260
        %1325 = vst [vmem:[%s343 + $0x20] sm:$0xff] %v1261
        %1326 = vst [vmem:[%s343 + $0x28] sm:$0xff] %v1262
        %1327 = vst [vmem:[%s343 + $0x30] sm:$0xff] %v1263
        %1328 = vst [vmem:[%s343 + $0x38] sm:$0xff] %v1264
        %1329 = vst [vmem:[%s343 + $0x40] sm:$0xff] %v1265
        %1330 = vst [vmem:[%s343 + $0x48] sm:$0xff] %v1266
        %1331 = vst [vmem:[%s343 + $0x50] sm:$0xff] %v1267
        %1332 = vst [vmem:[%s343 + $0x58] sm:$0xff] %v1268
        %1333 = vst [vmem:[%s343 + $0x60] sm:$0xff] %v1269
        %1334 = vst [vmem:[%s343 + $0x68] sm:$0xff] %v1270
        %1335 = vst [vmem:[%s343 + $0x70] sm:$0xff] %v1271
        %1336 = vst [vmem:[%s343 + $0x78] sm:$0xff] %v1272
        %1337 = vst [vmem:[%s343 + $0x80] sm:$0xff] %v1273
        %1338 = vst [vmem:[%s343 + $0x88] sm:$0xff] %v1274
        %1339 = vst [vmem:[%s343 + $0x90] sm:$0xff] %v1275
        %1340 = vst [vmem:[%s343 + $0x98] sm:$0xff] %v1276
        %1341 = vst [vmem:[%s343 + $0xa0] sm:$0xff] %v1277
        %1342 = vst [vmem:[%s343 + $0xa8] sm:$0xff] %v1278
        %1343 = vst [vmem:[%s343 + $0xb0] sm:$0xff] %v1279
        %1344 = vst [vmem:[%s343 + $0xb8] sm:$0xff] %v1280
        %1345 = vst [vmem:[%s343 + $0xc0] sm:$0xff] %v1281
        %1346 = vst [vmem:[%s343 + $0xc8] sm:$0xff] %v1282
        %1347 = vst [vmem:[%s343 + $0xd0] sm:$0xff] %v1283
        %1348 = vst [vmem:[%s343 + $0xd8] sm:$0xff] %v1284
        %1349 = vst [vmem:[%s343 + $0xe0] sm:$0xff] %v1285
        %1350 = vst [vmem:[%s343 + $0xe8] sm:$0xff] %v1286
        %1351 = vst [vmem:[%s343 + $0xf0] sm:$0xff] %v1287
        %1352 = vst [vmem:[%s343 + $0xf8] sm:$0xff] %v1288
        %1353 = vst [vmem:[%s343 + $0x100] sm:$0xff] %v1289
        %1354 = vst [vmem:[%s343 + $0x108] sm:$0xff] %v1290
        %1355 = vst [vmem:[%s343 + $0x110] sm:$0xff] %v1291
        %1356 = vst [vmem:[%s343 + $0x118] sm:$0xff] %v1292
        %1357 = vst [vmem:[%s343 + $0x120] sm:$0xff] %v1293
        %1358 = vst [vmem:[%s343 + $0x128] sm:$0xff] %v1294
        %1359 = vst [vmem:[%s343 + $0x130] sm:$0xff] %v1295
        %1360 = vst [vmem:[%s343 + $0x138] sm:$0xff] %v1296
        %1361 = vst [vmem:[%s343 + $0x140] sm:$0xff] %v1297
        %1362 = vst [vmem:[%s343 + $0x148] sm:$0xff] %v1298
        %1363 = vst [vmem:[%s343 + $0x150] sm:$0xff] %v1299
        %1364 = vst [vmem:[%s343 + $0x158] sm:$0xff] %v1300
        %1365 = vst [vmem:[%s343 + $0x160] sm:$0xff] %v1301
        %1366 = vst [vmem:[%s343 + $0x168] sm:$0xff] %v1302
        %1367 = vst [vmem:[%s343 + $0x170] sm:$0xff] %v1303
        %1368 = vst [vmem:[%s343 + $0x178] sm:$0xff] %v1304
        %1369 = vst [vmem:[%s343 + $0x180] sm:$0xff] %v1305
        %1370 = vst [vmem:[%s343 + $0x188] sm:$0xff] %v1306
        %1371 = vst [vmem:[%s343 + $0x190] sm:$0xff] %v1307
        %1372 = vst [vmem:[%s343 + $0x198] sm:$0xff] %v1308
        %1373 = vst [vmem:[%s343 + $0x1a0] sm:$0xff] %v1309
        %1374 = vst [vmem:[%s343 + $0x1a8] sm:$0xff] %v1310
        %1375 = vst [vmem:[%s343 + $0x1b0] sm:$0xff] %v1311
        %1376 = vst [vmem:[%s343 + $0x1b8] sm:$0xff] %v1312
        %1377 = vst [vmem:[%s343 + $0x1c0] sm:$0xff] %v1313
        %1378 = vst [vmem:[%s343 + $0x1c8] sm:$0xff] %v1314
        %1379 = vst [vmem:[%s343 + $0x1d0] sm:$0xff] %v1315
        %1380 = vst [vmem:[%s343 + $0x1d8] sm:$0xff] %v1316
        %1381 = vst [vmem:[%s343 + $0x1e0] sm:$0xff] %v1317
        %1382 = vst [vmem:[%s343 + $0x1e8] sm:$0xff] %v1318
        %1383 = vst [vmem:[%s343 + $0x1f0] sm:$0xff] %v1319
        %1384 = vst [vmem:[%s343 + $0x1f8] sm:$0xff] %v1320
        %v1385 = vpack.c.bf16 %v1258, %v1257
        %v1386 = vpack.c.bf16 %v1260, %v1259
        %v1387 = vpack.c.bf16 %v1262, %v1261
        %v1388 = vpack.c.bf16 %v1264, %v1263
        %v1389 = vpack.c.bf16 %v1266, %v1265
        %v1390 = vpack.c.bf16 %v1268, %v1267
        %v1391 = vpack.c.bf16 %v1270, %v1269
        %v1392 = vpack.c.bf16 %v1272, %v1271
        %v1393 = vpack.c.bf16 %v1274, %v1273
        %v1394 = vpack.c.bf16 %v1276, %v1275
        %v1395 = vpack.c.bf16 %v1278, %v1277
        %v1396 = vpack.c.bf16 %v1280, %v1279
        %v1397 = vpack.c.bf16 %v1282, %v1281
        %v1398 = vpack.c.bf16 %v1284, %v1283
        %v1399 = vpack.c.bf16 %v1286, %v1285
        %v1400 = vpack.c.bf16 %v1288, %v1287
        %v1401 = vpack.c.bf16 %v1290, %v1289
        %v1402 = vpack.c.bf16 %v1292, %v1291
        %v1403 = vpack.c.bf16 %v1294, %v1293
        %v1404 = vpack.c.bf16 %v1296, %v1295
        %v1405 = vpack.c.bf16 %v1298, %v1297
        %v1406 = vpack.c.bf16 %v1300, %v1299
        %v1407 = vpack.c.bf16 %v1302, %v1301
        %v1408 = vpack.c.bf16 %v1304, %v1303
        %v1409 = vpack.c.bf16 %v1306, %v1305
        %v1410 = vpack.c.bf16 %v1308, %v1307
        %v1411 = vpack.c.bf16 %v1310, %v1309
        %v1412 = vpack.c.bf16 %v1312, %v1311
        %v1413 = vpack.c.bf16 %v1314, %v1313
        %v1414 = vpack.c.bf16 %v1316, %v1315
        %v1415 = vpack.c.bf16 %v1318, %v1317
        %v1416 = vpack.c.bf16 %v1320, %v1319
        %v1417 = vld [vmem:[#allocation8] sm:$0xf]
        %v1418 = vld [vmem:[#allocation8 + $0x4] sm:$0xf]
        %v1419 = vld [vmem:[#allocation8 + $0x8] sm:$0xf]
        %v1420 = vld [vmem:[#allocation8 + $0xc] sm:$0xf]
        %v1421 = vld [vmem:[#allocation8 + $0x10] sm:$0xf]
        %v1422 = vld [vmem:[#allocation8 + $0x14] sm:$0xf]
        %v1423 = vld [vmem:[#allocation8 + $0x18] sm:$0xf]
        %v1424 = vld [vmem:[#allocation8 + $0x1c] sm:$0xf]
        %v1425 = vld [vmem:[#allocation8 + $0x20] sm:$0xf]
        %v1426 = vld [vmem:[#allocation8 + $0x24] sm:$0xf]
        %v1427 = vld [vmem:[#allocation8 + $0x28] sm:$0xf]
        %v1428 = vld [vmem:[#allocation8 + $0x2c] sm:$0xf]
        %v1429 = vld [vmem:[#allocation8 + $0x30] sm:$0xf]
        %v1430 = vld [vmem:[#allocation8 + $0x34] sm:$0xf]
        %v1431 = vld [vmem:[#allocation8 + $0x38] sm:$0xf]
        %v1432 = vld [vmem:[#allocation8 + $0x3c] sm:$0xf]
        %v1433 = vld [vmem:[%s4] sm:$0x1]
        %v1435 = vlaneseq
        %v1436 = vshrl.u32 %v1435, 7
        %v1437 = vsub.s32 0, %v1436
        %v1438 = vrot.slane %v1433, %v1437
        %v1456 = vunpack.c.l.b16 %v1417
        %v1457 = vunpack.c.l.b16 %v1418
        %v1458 = vunpack.c.l.b16 %v1419
        %v1459 = vunpack.c.l.b16 %v1420
        %v1460 = vunpack.c.l.b16 %v1421
        %v1461 = vunpack.c.l.b16 %v1422
        %v1462 = vunpack.c.l.b16 %v1423
        %v1463 = vunpack.c.l.b16 %v1424
        %v1464 = vunpack.c.l.b16 %v1425
        %v1465 = vunpack.c.l.b16 %v1426
        %v1466 = vunpack.c.l.b16 %v1427
        %v1467 = vunpack.c.l.b16 %v1428
        %v1468 = vunpack.c.l.b16 %v1429
        %v1469 = vunpack.c.l.b16 %v1430
        %v1470 = vunpack.c.l.b16 %v1431
        %v1471 = vunpack.c.l.b16 %v1432
        %v1472 = vpack.c.b16 %v1457, %v1456
        %v1473 = vpack.c.b16 %v1459, %v1458
        %v1474 = vpack.c.b16 %v1461, %v1460
        %v1475 = vpack.c.b16 %v1463, %v1462
        %v1476 = vpack.c.b16 %v1465, %v1464
        %v1477 = vpack.c.b16 %v1467, %v1466
        %v1478 = vpack.c.b16 %v1469, %v1468
        %v1479 = vpack.c.b16 %v1471, %v1470
        %1488 = vmatprep.subr.bf16.mxu0 0
        %1489 = vmatpush1.bf16.msra.mxu0 %v1479
        %1490 = vmatprep.subr.bf16.mxu0 0
        %1491 = vmatpush1.bf16.msra.mxu0 %v1478
        %1492 = vmatprep.subr.bf16.mxu0 0
        %1493 = vmatpush1.bf16.msra.mxu0 %v1477
        %1494 = vmatprep.subr.bf16.mxu0 0
        %1495 = vmatpush1.bf16.msra.mxu0 %v1476
        %1496 = vmatprep.subr.bf16.mxu0 0
        %1497 = vmatpush1.bf16.msra.mxu0 %v1475
        %1498 = vmatprep.subr.bf16.mxu0 0
        %1499 = vmatpush1.bf16.msra.mxu0 %v1474
        %1500 = vmatprep.subr.bf16.mxu0 0
        %1501 = vmatpush1.bf16.msra.mxu0 %v1473
        %1502 = vmatprep.subr.bf16.mxu0 0
        %1503 = vmatpush1.bf16.msra.mxu0 %v1472
        %1504 = vmatprep.subr.bf16.mxu0 0
        %1505 = vmatpush2.bf16.msra.mxu0 0
        %1506 = vmatprep.subr.bf16.mxu0 0
        %1507 = vmatpush2.bf16.msra.mxu0 0
        %1508 = vmatprep.subr.bf16.mxu0 0
        %1509 = vmatpush2.bf16.msra.mxu0 0
        %1510 = vmatprep.subr.bf16.mxu0 0
        %1511 = vmatpush2.bf16.msra.mxu0 0
        %1512 = vmatprep.subr.bf16.mxu0 0
        %1513 = vmatpush2.bf16.msra.mxu0 0
        %1514 = vmatprep.subr.bf16.mxu0 0
        %1515 = vmatpush2.bf16.msra.mxu0 0
        %1516 = vmatprep.subr.bf16.mxu0 0
        %1517 = vmatpush2.bf16.msra.mxu0 0
        %1518 = vmatprep.subr.bf16.mxu0 0
        %1519 = vmatpush2.bf16.msra.mxu0 0
        %1520 = vmatprep.mubr.bf16.mxu0 0
        %1521 = vmatmul.mubr.bf16.gmra.mxu0 %v1385
        %v1522 = vpop.f32.mrf.mxu0
        %v1523 = vadd.f32 %v1438, %v1522
        %v1524 = vpop.f32.mrf.mxu0
        %v1525 = vpop.f32.mrf.mxu0
        %v1526 = vadd.f32 %v1438, %v1525
        %v1527 = vpop.f32.mrf.mxu0
        %1528 = vmatprep.mubr.bf16.mxu0 0
        %1529 = vmatmul.mubr.bf16.gmra.mxu0 %v1386
        %v1530 = vpop.f32.mrf.mxu0
        %v1531 = vadd.f32 %v1438, %v1530
        %v1532 = vpop.f32.mrf.mxu0
        %v1533 = vpop.f32.mrf.mxu0
        %v1534 = vadd.f32 %v1438, %v1533
        %v1535 = vpop.f32.mrf.mxu0
        %1536 = vmatprep.mubr.bf16.mxu0 0
        %1537 = vmatmul.mubr.bf16.gmra.mxu0 %v1387
        %v1538 = vpop.f32.mrf.mxu0
        %v1539 = vadd.f32 %v1438, %v1538
        %v1540 = vpop.f32.mrf.mxu0
        %v1541 = vpop.f32.mrf.mxu0
        %v1542 = vadd.f32 %v1438, %v1541
        %v1543 = vpop.f32.mrf.mxu0
        %1544 = vmatprep.mubr.bf16.mxu0 0
        %1545 = vmatmul.mubr.bf16.gmra.mxu0 %v1388
        %v1546 = vpop.f32.mrf.mxu0
        %v1547 = vadd.f32 %v1438, %v1546
        %v1548 = vpop.f32.mrf.mxu0
        %v1549 = vpop.f32.mrf.mxu0
        %v1550 = vadd.f32 %v1438, %v1549
        %v1551 = vpop.f32.mrf.mxu0
        %1552 = vmatprep.mubr.bf16.mxu0 0
        %1553 = vmatmul.mubr.bf16.gmra.mxu0 %v1389
        %v1554 = vpop.f32.mrf.mxu0
        %v1555 = vadd.f32 %v1438, %v1554
        %v1556 = vpop.f32.mrf.mxu0
        %v1557 = vpop.f32.mrf.mxu0
        %v1558 = vadd.f32 %v1438, %v1557
        %v1559 = vpop.f32.mrf.mxu0
        %1560 = vmatprep.mubr.bf16.mxu0 0
        %1561 = vmatmul.mubr.bf16.gmra.mxu0 %v1390
        %v1562 = vpop.f32.mrf.mxu0
        %v1563 = vadd.f32 %v1438, %v1562
        %v1564 = vpop.f32.mrf.mxu0
        %v1565 = vpop.f32.mrf.mxu0
        %v1566 = vadd.f32 %v1438, %v1565
        %v1567 = vpop.f32.mrf.mxu0
        %1568 = vmatprep.mubr.bf16.mxu0 0
        %1569 = vmatmul.mubr.bf16.gmra.mxu0 %v1391
        %v1570 = vpop.f32.mrf.mxu0
        %v1571 = vadd.f32 %v1438, %v1570
        %v1572 = vpop.f32.mrf.mxu0
        %v1573 = vpop.f32.mrf.mxu0
        %v1574 = vadd.f32 %v1438, %v1573
        %v1575 = vpop.f32.mrf.mxu0
        %1576 = vmatprep.mubr.bf16.mxu0 0
        %1577 = vmatmul.mubr.bf16.gmra.mxu0 %v1392
        %v1578 = vpop.f32.mrf.mxu0
        %v1579 = vadd.f32 %v1438, %v1578
        %v1580 = vpop.f32.mrf.mxu0
        %v1581 = vpop.f32.mrf.mxu0
        %v1582 = vadd.f32 %v1438, %v1581
        %v1583 = vpop.f32.mrf.mxu0
        %1584 = vmatprep.mubr.bf16.mxu0 0
        %1585 = vmatmul.mubr.bf16.gmra.mxu0 %v1393
        %v1586 = vpop.f32.mrf.mxu0
        %v1587 = vadd.f32 %v1438, %v1586
        %v1588 = vpop.f32.mrf.mxu0
        %v1589 = vpop.f32.mrf.mxu0
        %v1590 = vadd.f32 %v1438, %v1589
        %v1591 = vpop.f32.mrf.mxu0
        %1592 = vmatprep.mubr.bf16.mxu0 0
        %1593 = vmatmul.mubr.bf16.gmra.mxu0 %v1394
        %v1594 = vpop.f32.mrf.mxu0
        %v1595 = vadd.f32 %v1438, %v1594
        %v1596 = vpop.f32.mrf.mxu0
        %v1597 = vpop.f32.mrf.mxu0
        %v1598 = vadd.f32 %v1438, %v1597
        %v1599 = vpop.f32.mrf.mxu0
        %1600 = vmatprep.mubr.bf16.mxu0 0
        %1601 = vmatmul.mubr.bf16.gmra.mxu0 %v1395
        %v1602 = vpop.f32.mrf.mxu0
        %v1603 = vadd.f32 %v1438, %v1602
        %v1604 = vpop.f32.mrf.mxu0
        %v1605 = vpop.f32.mrf.mxu0
        %v1606 = vadd.f32 %v1438, %v1605
        %v1607 = vpop.f32.mrf.mxu0
        %1608 = vmatprep.mubr.bf16.mxu0 0
        %1609 = vmatmul.mubr.bf16.gmra.mxu0 %v1396
        %v1610 = vpop.f32.mrf.mxu0
        %v1611 = vadd.f32 %v1438, %v1610
        %v1612 = vpop.f32.mrf.mxu0
        %v1613 = vpop.f32.mrf.mxu0
        %v1614 = vadd.f32 %v1438, %v1613
        %v1615 = vpop.f32.mrf.mxu0
        %1616 = vmatprep.mubr.bf16.mxu0 0
        %1617 = vmatmul.mubr.bf16.gmra.mxu0 %v1397
        %v1618 = vpop.f32.mrf.mxu0
        %v1619 = vadd.f32 %v1438, %v1618
        %v1620 = vpop.f32.mrf.mxu0
        %v1621 = vpop.f32.mrf.mxu0
        %v1622 = vadd.f32 %v1438, %v1621
        %v1623 = vpop.f32.mrf.mxu0
        %1624 = vmatprep.mubr.bf16.mxu0 0
        %1625 = vmatmul.mubr.bf16.gmra.mxu0 %v1398
        %v1626 = vpop.f32.mrf.mxu0
        %v1627 = vadd.f32 %v1438, %v1626
        %v1628 = vpop.f32.mrf.mxu0
        %v1629 = vpop.f32.mrf.mxu0
        %v1630 = vadd.f32 %v1438, %v1629
        %v1631 = vpop.f32.mrf.mxu0
        %1632 = vmatprep.mubr.bf16.mxu0 0
        %1633 = vmatmul.mubr.bf16.gmra.mxu0 %v1399
        %v1634 = vpop.f32.mrf.mxu0
        %v1635 = vadd.f32 %v1438, %v1634
        %v1636 = vpop.f32.mrf.mxu0
        %v1637 = vpop.f32.mrf.mxu0
        %v1638 = vadd.f32 %v1438, %v1637
        %v1639 = vpop.f32.mrf.mxu0
        %1640 = vmatprep.mubr.bf16.mxu0 0
        %1641 = vmatmul.mubr.bf16.gmra.mxu0 %v1400
        %v1642 = vpop.f32.mrf.mxu0
        %v1643 = vadd.f32 %v1438, %v1642
        %v1644 = vpop.f32.mrf.mxu0
        %v1645 = vpop.f32.mrf.mxu0
        %v1646 = vadd.f32 %v1438, %v1645
        %v1647 = vpop.f32.mrf.mxu0
        %1648 = vmatprep.mubr.bf16.mxu0 0
        %1649 = vmatmul.mubr.bf16.gmra.mxu0 %v1401
        %v1650 = vpop.f32.mrf.mxu0
        %v1651 = vadd.f32 %v1438, %v1650
        %v1652 = vpop.f32.mrf.mxu0
        %v1653 = vpop.f32.mrf.mxu0
        %v1654 = vadd.f32 %v1438, %v1653
        %v1655 = vpop.f32.mrf.mxu0
        %1656 = vmatprep.mubr.bf16.mxu0 0
        %1657 = vmatmul.mubr.bf16.gmra.mxu0 %v1402
        %v1658 = vpop.f32.mrf.mxu0
        %v1659 = vadd.f32 %v1438, %v1658
        %v1660 = vpop.f32.mrf.mxu0
        %v1661 = vpop.f32.mrf.mxu0
        %v1662 = vadd.f32 %v1438, %v1661
        %v1663 = vpop.f32.mrf.mxu0
        %1664 = vmatprep.mubr.bf16.mxu0 0
        %1665 = vmatmul.mubr.bf16.gmra.mxu0 %v1403
        %v1666 = vpop.f32.mrf.mxu0
        %v1667 = vadd.f32 %v1438, %v1666
        %v1668 = vpop.f32.mrf.mxu0
        %v1669 = vpop.f32.mrf.mxu0
        %v1670 = vadd.f32 %v1438, %v1669
        %v1671 = vpop.f32.mrf.mxu0
        %1672 = vmatprep.mubr.bf16.mxu0 0
        %1673 = vmatmul.mubr.bf16.gmra.mxu0 %v1404
        %v1674 = vpop.f32.mrf.mxu0
        %v1675 = vadd.f32 %v1438, %v1674
        %v1676 = vpop.f32.mrf.mxu0
        %v1677 = vpop.f32.mrf.mxu0
        %v1678 = vadd.f32 %v1438, %v1677
        %v1679 = vpop.f32.mrf.mxu0
        %1680 = vmatprep.mubr.bf16.mxu0 0
        %1681 = vmatmul.mubr.bf16.gmra.mxu0 %v1405
        %v1682 = vpop.f32.mrf.mxu0
        %v1683 = vadd.f32 %v1438, %v1682
        %v1684 = vpop.f32.mrf.mxu0
        %v1685 = vpop.f32.mrf.mxu0
        %v1686 = vadd.f32 %v1438, %v1685
        %v1687 = vpop.f32.mrf.mxu0
        %1688 = vmatprep.mubr.bf16.mxu0 0
        %1689 = vmatmul.mubr.bf16.gmra.mxu0 %v1406
        %v1690 = vpop.f32.mrf.mxu0
        %v1691 = vadd.f32 %v1438, %v1690
        %v1692 = vpop.f32.mrf.mxu0
        %v1693 = vpop.f32.mrf.mxu0
        %v1694 = vadd.f32 %v1438, %v1693
        %v1695 = vpop.f32.mrf.mxu0
        %1696 = vmatprep.mubr.bf16.mxu0 0
        %1697 = vmatmul.mubr.bf16.gmra.mxu0 %v1407
        %v1698 = vpop.f32.mrf.mxu0
        %v1699 = vadd.f32 %v1438, %v1698
        %v1700 = vpop.f32.mrf.mxu0
        %v1701 = vpop.f32.mrf.mxu0
        %v1702 = vadd.f32 %v1438, %v1701
        %v1703 = vpop.f32.mrf.mxu0
        %1704 = vmatprep.mubr.bf16.mxu0 0
        %1705 = vmatmul.mubr.bf16.gmra.mxu0 %v1408
        %v1706 = vpop.f32.mrf.mxu0
        %v1707 = vadd.f32 %v1438, %v1706
        %v1708 = vpop.f32.mrf.mxu0
        %v1709 = vpop.f32.mrf.mxu0
        %v1710 = vadd.f32 %v1438, %v1709
        %v1711 = vpop.f32.mrf.mxu0
        %1712 = vmatprep.mubr.bf16.mxu0 0
        %1713 = vmatmul.mubr.bf16.gmra.mxu0 %v1409
        %v1714 = vpop.f32.mrf.mxu0
        %v1715 = vadd.f32 %v1438, %v1714
        %v1716 = vpop.f32.mrf.mxu0
        %v1717 = vpop.f32.mrf.mxu0
        %v1718 = vadd.f32 %v1438, %v1717
        %v1719 = vpop.f32.mrf.mxu0
        %1720 = vmatprep.mubr.bf16.mxu0 0
        %1721 = vmatmul.mubr.bf16.gmra.mxu0 %v1410
        %v1722 = vpop.f32.mrf.mxu0
        %v1723 = vadd.f32 %v1438, %v1722
        %v1724 = vpop.f32.mrf.mxu0
        %v1725 = vpop.f32.mrf.mxu0
        %v1726 = vadd.f32 %v1438, %v1725
        %v1727 = vpop.f32.mrf.mxu0
        %1728 = vmatprep.mubr.bf16.mxu0 0
        %1729 = vmatmul.mubr.bf16.gmra.mxu0 %v1411
        %v1730 = vpop.f32.mrf.mxu0
        %v1731 = vadd.f32 %v1438, %v1730
        %v1732 = vpop.f32.mrf.mxu0
        %v1733 = vpop.f32.mrf.mxu0
        %v1734 = vadd.f32 %v1438, %v1733
        %v1735 = vpop.f32.mrf.mxu0
        %1736 = vmatprep.mubr.bf16.mxu0 0
        %1737 = vmatmul.mubr.bf16.gmra.mxu0 %v1412
        %v1738 = vpop.f32.mrf.mxu0
        %v1739 = vadd.f32 %v1438, %v1738
        %v1740 = vpop.f32.mrf.mxu0
        %v1741 = vpop.f32.mrf.mxu0
        %v1742 = vadd.f32 %v1438, %v1741
        %v1743 = vpop.f32.mrf.mxu0
        %1744 = vmatprep.mubr.bf16.mxu0 0
        %1745 = vmatmul.mubr.bf16.gmra.mxu0 %v1413
        %v1746 = vpop.f32.mrf.mxu0
        %v1747 = vadd.f32 %v1438, %v1746
        %v1748 = vpop.f32.mrf.mxu0
        %v1749 = vpop.f32.mrf.mxu0
        %v1750 = vadd.f32 %v1438, %v1749
        %v1751 = vpop.f32.mrf.mxu0
        %1752 = vmatprep.mubr.bf16.mxu0 0
        %1753 = vmatmul.mubr.bf16.gmra.mxu0 %v1414
        %v1754 = vpop.f32.mrf.mxu0
        %v1755 = vadd.f32 %v1438, %v1754
        %v1756 = vpop.f32.mrf.mxu0
        %v1757 = vpop.f32.mrf.mxu0
        %v1758 = vadd.f32 %v1438, %v1757
        %v1759 = vpop.f32.mrf.mxu0
        %1760 = vmatprep.mubr.bf16.mxu0 0
        %1761 = vmatmul.mubr.bf16.gmra.mxu0 %v1415
        %v1762 = vpop.f32.mrf.mxu0
        %v1763 = vadd.f32 %v1438, %v1762
        %v1764 = vpop.f32.mrf.mxu0
        %v1765 = vpop.f32.mrf.mxu0
        %v1766 = vadd.f32 %v1438, %v1765
        %v1767 = vpop.f32.mrf.mxu0
        %1768 = vmatprep.mubr.bf16.mxu0 0
        %1769 = vmatmul.mubr.bf16.gmra.mxu0 %v1416
        %v1770 = vpop.f32.mrf.mxu0
        %v1771 = vadd.f32 %v1438, %v1770
        %v1772 = vpop.f32.mrf.mxu0
        %v1773 = vpop.f32.mrf.mxu0
        %v1774 = vadd.f32 %v1438, %v1773
        %v1775 = vpop.f32.mrf.mxu0
        %1776 = vdwg.mxu0
        %v1777 = vtanh.pop %v1523
        %v1778 = vtanh.pop %v1526
        %v1779 = vtanh.pop %v1531
        %v1780 = vtanh.pop %v1534
        %v1781 = vtanh.pop %v1539
        %v1782 = vtanh.pop %v1542
        %v1783 = vtanh.pop %v1547
        %v1784 = vtanh.pop %v1550
        %v1785 = vtanh.pop %v1555
        %v1786 = vtanh.pop %v1558
        %v1787 = vtanh.pop %v1563
        %v1788 = vtanh.pop %v1566
        %v1789 = vtanh.pop %v1571
        %v1790 = vtanh.pop %v1574
        %v1791 = vtanh.pop %v1579
        %v1792 = vtanh.pop %v1582
        %v1793 = vtanh.pop %v1587
        %v1794 = vtanh.pop %v1590
        %v1795 = vtanh.pop %v1595
        %v1796 = vtanh.pop %v1598
        %v1797 = vtanh.pop %v1603
        %v1798 = vtanh.pop %v1606
        %v1799 = vtanh.pop %v1611
        %v1800 = vtanh.pop %v1614
        %v1801 = vtanh.pop %v1619
        %v1802 = vtanh.pop %v1622
        %v1803 = vtanh.pop %v1627
        %v1804 = vtanh.pop %v1630
        %v1805 = vtanh.pop %v1635
        %v1806 = vtanh.pop %v1638
        %v1807 = vtanh.pop %v1643
        %v1808 = vtanh.pop %v1646
        %v1809 = vtanh.pop %v1651
        %v1810 = vtanh.pop %v1654
        %v1811 = vtanh.pop %v1659
        %v1812 = vtanh.pop %v1662
        %v1813 = vtanh.pop %v1667
        %v1814 = vtanh.pop %v1670
        %v1815 = vtanh.pop %v1675
        %v1816 = vtanh.pop %v1678
        %v1817 = vtanh.pop %v1683
        %v1818 = vtanh.pop %v1686
        %v1819 = vtanh.pop %v1691
        %v1820 = vtanh.pop %v1694
        %v1821 = vtanh.pop %v1699
        %v1822 = vtanh.pop %v1702
        %v1823 = vtanh.pop %v1707
        %v1824 = vtanh.pop %v1710
        %v1825 = vtanh.pop %v1715
        %v1826 = vtanh.pop %v1718
        %v1827 = vtanh.pop %v1723
        %v1828 = vtanh.pop %v1726
        %v1829 = vtanh.pop %v1731
        %v1830 = vtanh.pop %v1734
        %v1831 = vtanh.pop %v1739
        %v1832 = vtanh.pop %v1742
        %v1833 = vtanh.pop %v1747
        %v1834 = vtanh.pop %v1750
        %v1835 = vtanh.pop %v1755
        %v1836 = vtanh.pop %v1758
        %v1837 = vtanh.pop %v1763
        %v1838 = vtanh.pop %v1766
        %v1839 = vtanh.pop %v1771
        %v1840 = vtanh.pop %v1774
        %v1841 = vld [vmem:[#allocation9] sm:$0xf]
        %v1842 = vld [vmem:[#allocation9 + $0x4] sm:$0xf]
        %v1843 = vld [vmem:[#allocation9 + $0x8] sm:$0xf]
        %v1844 = vld [vmem:[#allocation9 + $0xc] sm:$0xf]
        %v1845 = vld [vmem:[#allocation9 + $0x10] sm:$0xf]
        %v1846 = vld [vmem:[#allocation9 + $0x14] sm:$0xf]
        %v1847 = vld [vmem:[#allocation9 + $0x18] sm:$0xf]
        %v1848 = vld [vmem:[#allocation9 + $0x1c] sm:$0xf]
        %v1849 = vld [vmem:[#allocation9 + $0x20] sm:$0xf]
        %v1850 = vld [vmem:[#allocation9 + $0x24] sm:$0xf]
        %v1851 = vld [vmem:[#allocation9 + $0x28] sm:$0xf]
        %v1852 = vld [vmem:[#allocation9 + $0x2c] sm:$0xf]
        %v1853 = vld [vmem:[#allocation9 + $0x30] sm:$0xf]
        %v1854 = vld [vmem:[#allocation9 + $0x34] sm:$0xf]
        %v1855 = vld [vmem:[#allocation9 + $0x38] sm:$0xf]
        %v1856 = vld [vmem:[#allocation9 + $0x3c] sm:$0xf]
        %v1857 = vpack.c.bf16 %v1778, %v1777
        %v1858 = vpack.c.bf16 %v1780, %v1779
        %v1859 = vpack.c.bf16 %v1782, %v1781
        %v1860 = vpack.c.bf16 %v1784, %v1783
        %v1861 = vpack.c.bf16 %v1786, %v1785
        %v1862 = vpack.c.bf16 %v1788, %v1787
        %v1863 = vpack.c.bf16 %v1790, %v1789
        %v1864 = vpack.c.bf16 %v1792, %v1791
        %v1865 = vpack.c.bf16 %v1794, %v1793
        %v1866 = vpack.c.bf16 %v1796, %v1795
        %v1867 = vpack.c.bf16 %v1798, %v1797
        %v1868 = vpack.c.bf16 %v1800, %v1799
        %v1869 = vpack.c.bf16 %v1802, %v1801
        %v1870 = vpack.c.bf16 %v1804, %v1803
        %v1871 = vpack.c.bf16 %v1806, %v1805
        %v1872 = vpack.c.bf16 %v1808, %v1807
        %v1873 = vpack.c.bf16 %v1810, %v1809
        %v1874 = vpack.c.bf16 %v1812, %v1811
        %v1875 = vpack.c.bf16 %v1814, %v1813
        %v1876 = vpack.c.bf16 %v1816, %v1815
        %v1877 = vpack.c.bf16 %v1818, %v1817
        %v1878 = vpack.c.bf16 %v1820, %v1819
        %v1879 = vpack.c.bf16 %v1822, %v1821
        %v1880 = vpack.c.bf16 %v1824, %v1823
        %v1881 = vpack.c.bf16 %v1826, %v1825
        %v1882 = vpack.c.bf16 %v1828, %v1827
        %v1883 = vpack.c.bf16 %v1830, %v1829
        %v1884 = vpack.c.bf16 %v1832, %v1831
        %v1885 = vpack.c.bf16 %v1834, %v1833
        %v1886 = vpack.c.bf16 %v1836, %v1835
        %v1887 = vpack.c.bf16 %v1838, %v1837
        %v1888 = vpack.c.bf16 %v1840, %v1839
        %v1905 = vunpack.c.l.b16 %v1841
        %v1906 = vunpack.c.l.b16 %v1842
        %v1907 = vunpack.c.l.b16 %v1843
        %v1908 = vunpack.c.l.b16 %v1844
        %v1909 = vunpack.c.l.b16 %v1845
        %v1910 = vunpack.c.l.b16 %v1846
        %v1911 = vunpack.c.l.b16 %v1847
        %v1912 = vunpack.c.l.b16 %v1848
        %v1913 = vunpack.c.l.b16 %v1849
        %v1914 = vunpack.c.l.b16 %v1850
        %v1915 = vunpack.c.l.b16 %v1851
        %v1916 = vunpack.c.l.b16 %v1852
        %v1917 = vunpack.c.l.b16 %v1853
        %v1918 = vunpack.c.l.b16 %v1854
        %v1919 = vunpack.c.l.b16 %v1855
        %v1920 = vunpack.c.l.b16 %v1856
        %v1921 = vpack.c.b16 %v1906, %v1905
        %v1922 = vpack.c.b16 %v1908, %v1907
        %v1923 = vpack.c.b16 %v1910, %v1909
        %v1924 = vpack.c.b16 %v1912, %v1911
        %v1925 = vpack.c.b16 %v1914, %v1913
        %v1926 = vpack.c.b16 %v1916, %v1915
        %v1927 = vpack.c.b16 %v1918, %v1917
        %v1928 = vpack.c.b16 %v1920, %v1919
        %1937 = vmatprep.subr.bf16.mxu0 0
        %1938 = vmatpush1.bf16.xpose.msra.mxu0 %v1864
        %1939 = vmatprep.subr.bf16.mxu0 0
        %1940 = vmatpush1.bf16.xpose.msra.mxu0 %v1863
        %1941 = vmatprep.subr.bf16.mxu0 0
        %1942 = vmatpush1.bf16.xpose.msra.mxu0 %v1862
        %1943 = vmatprep.subr.bf16.mxu0 0
        %1944 = vmatpush1.bf16.xpose.msra.mxu0 %v1861
        %1945 = vmatprep.subr.bf16.mxu0 0
        %1946 = vmatpush1.bf16.xpose.msra.mxu0 %v1860
        %1947 = vmatprep.subr.bf16.mxu0 0
        %1948 = vmatpush1.bf16.xpose.msra.mxu0 %v1859
        %1949 = vmatprep.subr.bf16.mxu0 0
        %1950 = vmatpush1.bf16.xpose.msra.mxu0 %v1858
        %1951 = vmatprep.subr.bf16.mxu0 0
        %1952 = vmatpush1.bf16.xpose.msra.mxu0 %v1857
        %1953 = vmatprep.subr.bf16.mxu0 0
        %1954 = vmatpush2.bf16.xpose.msra.mxu0 %v1872
        %1955 = vmatprep.subr.bf16.mxu0 0
        %1956 = vmatpush2.bf16.xpose.msra.mxu0 %v1871
        %1957 = vmatprep.subr.bf16.mxu0 0
        %1958 = vmatpush2.bf16.xpose.msra.mxu0 %v1870
        %1959 = vmatprep.subr.bf16.mxu0 0
        %1960 = vmatpush2.bf16.xpose.msra.mxu0 %v1869
        %1961 = vmatprep.subr.bf16.mxu0 0
        %1962 = vmatpush2.bf16.xpose.msra.mxu0 %v1868
        %1963 = vmatprep.subr.bf16.mxu0 0
        %1964 = vmatpush2.bf16.xpose.msra.mxu0 %v1867
        %1965 = vmatprep.subr.bf16.mxu0 0
        %1966 = vmatpush2.bf16.xpose.msra.mxu0 %v1866
        %1967 = vmatprep.subr.bf16.mxu0 0
        %1968 = vmatpush2.bf16.xpose.msra.mxu0 %v1865
        %1969 = vmatprep.mubr.bf16.mxu0 0
        %1970 = vmatmul.mubr.bf16.gmra.mxu0 %v1921
        %v1971 = vpop.f32.mrf.mxu0
        %v1972 = vadd.f32 0.0, %v1971
        %v1973 = vpop.f32.mrf.mxu0
        %v1974 = vadd.f32 0.0, %v1973
        %v1975 = vpop.f32.mrf.mxu0
        %v1976 = vpop.f32.mrf.mxu0
        %1977 = vmatprep.mubr.bf16.mxu0 0
        %1978 = vmatmul.mubr.bf16.gmra.mxu0 %v1922
        %v1979 = vpop.f32.mrf.mxu0
        %v1980 = vpop.f32.mrf.mxu0
        %v1981 = vpop.f32.mrf.mxu0
        %v1982 = vpop.f32.mrf.mxu0
        %1983 = vmatprep.mubr.bf16.mxu0 0
        %1984 = vmatmul.mubr.bf16.gmra.mxu0 %v1923
        %v1985 = vpop.f32.mrf.mxu0
        %v1986 = vpop.f32.mrf.mxu0
        %v1987 = vpop.f32.mrf.mxu0
        %v1988 = vpop.f32.mrf.mxu0
        %1989 = vmatprep.mubr.bf16.mxu0 0
        %1990 = vmatmul.mubr.bf16.gmra.mxu0 %v1924
        %v1991 = vpop.f32.mrf.mxu0
        %v1992 = vpop.f32.mrf.mxu0
        %v1993 = vpop.f32.mrf.mxu0
        %v1994 = vpop.f32.mrf.mxu0
        %1995 = vmatprep.mubr.bf16.mxu0 0
        %1996 = vmatmul.mubr.bf16.gmra.mxu0 %v1925
        %v1997 = vpop.f32.mrf.mxu0
        %v1998 = vpop.f32.mrf.mxu0
        %v1999 = vpop.f32.mrf.mxu0
        %v2000 = vpop.f32.mrf.mxu0
        %2001 = vmatprep.mubr.bf16.mxu0 0
        %2002 = vmatmul.mubr.bf16.gmra.mxu0 %v1926
        %v2003 = vpop.f32.mrf.mxu0
        %v2004 = vpop.f32.mrf.mxu0
        %v2005 = vpop.f32.mrf.mxu0
        %v2006 = vpop.f32.mrf.mxu0
        %2007 = vmatprep.mubr.bf16.mxu0 0
        %2008 = vmatmul.mubr.bf16.gmra.mxu0 %v1927
        %v2009 = vpop.f32.mrf.mxu0
        %v2010 = vpop.f32.mrf.mxu0
        %v2011 = vpop.f32.mrf.mxu0
        %v2012 = vpop.f32.mrf.mxu0
        %2013 = vmatprep.mubr.bf16.mxu0 0
        %2014 = vmatmul.mubr.bf16.gmra.mxu0 %v1928
        %v2015 = vpop.f32.mrf.mxu0
        %v2016 = vpop.f32.mrf.mxu0
        %v2017 = vpop.f32.mrf.mxu0
        %v2018 = vpop.f32.mrf.mxu0
        %2019 = vdwg.mxu0
        %2020 = vmatprep.subr.bf16.mxu0 0
        %2021 = vmatpush1.bf16.xpose.msra.mxu0 %v1880
        %2022 = vmatprep.subr.bf16.mxu0 0
        %2023 = vmatpush1.bf16.xpose.msra.mxu0 %v1879
        %2024 = vmatprep.subr.bf16.mxu0 0
        %2025 = vmatpush1.bf16.xpose.msra.mxu0 %v1878
        %2026 = vmatprep.subr.bf16.mxu0 0
        %2027 = vmatpush1.bf16.xpose.msra.mxu0 %v1877
        %2028 = vmatprep.subr.bf16.mxu0 0
        %2029 = vmatpush1.bf16.xpose.msra.mxu0 %v1876
        %2030 = vmatprep.subr.bf16.mxu0 0
        %2031 = vmatpush1.bf16.xpose.msra.mxu0 %v1875
        %2032 = vmatprep.subr.bf16.mxu0 0
        %2033 = vmatpush1.bf16.xpose.msra.mxu0 %v1874
        %2034 = vmatprep.subr.bf16.mxu0 0
        %2035 = vmatpush1.bf16.xpose.msra.mxu0 %v1873
        %2036 = vmatprep.subr.bf16.mxu0 0
        %2037 = vmatpush2.bf16.xpose.msra.mxu0 %v1888
        %2038 = vmatprep.subr.bf16.mxu0 0
        %2039 = vmatpush2.bf16.xpose.msra.mxu0 %v1887
        %2040 = vmatprep.subr.bf16.mxu0 0
        %2041 = vmatpush2.bf16.xpose.msra.mxu0 %v1886
        %2042 = vmatprep.subr.bf16.mxu0 0
        %2043 = vmatpush2.bf16.xpose.msra.mxu0 %v1885
        %2044 = vmatprep.subr.bf16.mxu0 0
        %2045 = vmatpush2.bf16.xpose.msra.mxu0 %v1884
        %2046 = vmatprep.subr.bf16.mxu0 0
        %2047 = vmatpush2.bf16.xpose.msra.mxu0 %v1883
        %2048 = vmatprep.subr.bf16.mxu0 0
        %2049 = vmatpush2.bf16.xpose.msra.mxu0 %v1882
        %2050 = vmatprep.subr.bf16.mxu0 0
        %2051 = vmatpush2.bf16.xpose.msra.mxu0 %v1881
        %2052 = vmatprep.mubr.bf16.mxu0 0
        %2053 = vmatmul.mubr.bf16.gmra.mxu0 %v1921
        %v2054 = vpop.f32.mrf.mxu0
        %v2055 = vadd.f32 0.0, %v2054
        %v2056 = vpop.f32.mrf.mxu0
        %v2057 = vadd.f32 0.0, %v2056
        %v2058 = vpop.f32.mrf.mxu0
        %v2059 = vpop.f32.mrf.mxu0
        %2060 = vmatprep.mubr.bf16.mxu0 0
        %2061 = vmatmul.mubr.bf16.gmra.mxu0 %v1922
        %v2062 = vpop.f32.mrf.mxu0
        %v2063 = vpop.f32.mrf.mxu0
        %v2064 = vpop.f32.mrf.mxu0
        %v2065 = vpop.f32.mrf.mxu0
        %2066 = vmatprep.mubr.bf16.mxu0 0
        %2067 = vmatmul.mubr.bf16.gmra.mxu0 %v1923
        %v2068 = vpop.f32.mrf.mxu0
        %v2069 = vpop.f32.mrf.mxu0
        %v2070 = vpop.f32.mrf.mxu0
        %v2071 = vpop.f32.mrf.mxu0
        %2072 = vmatprep.mubr.bf16.mxu0 0
        %2073 = vmatmul.mubr.bf16.gmra.mxu0 %v1924
        %v2074 = vpop.f32.mrf.mxu0
        %v2075 = vpop.f32.mrf.mxu0
        %v2076 = vpop.f32.mrf.mxu0
        %v2077 = vpop.f32.mrf.mxu0
        %2078 = vmatprep.mubr.bf16.mxu0 0
        %2079 = vmatmul.mubr.bf16.gmra.mxu0 %v1925
        %v2080 = vpop.f32.mrf.mxu0
        %v2081 = vpop.f32.mrf.mxu0
        %v2082 = vpop.f32.mrf.mxu0
        %v2083 = vpop.f32.mrf.mxu0
        %2084 = vmatprep.mubr.bf16.mxu0 0
        %2085 = vmatmul.mubr.bf16.gmra.mxu0 %v1926
        %v2086 = vpop.f32.mrf.mxu0
        %v2087 = vpop.f32.mrf.mxu0
        %v2088 = vpop.f32.mrf.mxu0
        %v2089 = vpop.f32.mrf.mxu0
        %2090 = vmatprep.mubr.bf16.mxu0 0
        %2091 = vmatmul.mubr.bf16.gmra.mxu0 %v1927
        %v2092 = vpop.f32.mrf.mxu0
        %v2093 = vpop.f32.mrf.mxu0
        %v2094 = vpop.f32.mrf.mxu0
        %v2095 = vpop.f32.mrf.mxu0
        %2096 = vmatprep.mubr.bf16.mxu0 0
        %2097 = vmatmul.mubr.bf16.gmra.mxu0 %v1928
        %v2098 = vpop.f32.mrf.mxu0
        %v2099 = vpop.f32.mrf.mxu0
        %v2100 = vpop.f32.mrf.mxu0
        %v2101 = vpop.f32.mrf.mxu0
        %2102 = vdwg.mxu0
        %v2103 = vld [vmem:[#allocation6] sm:$0xff]
        %2104 = vmatprep.subr.mxu0 0.0
        %2105 = vmatpush1.xpose.msra.mxu0 %v369
        %2106 = vmatprep.subr.mxu0 0.0
        %2107 = vmatpush1.xpose.msra.mxu0 %v368
        %2108 = vmatprep.subr.mxu0 0.0
        %2109 = vmatpush1.xpose.msra.mxu0 %v367
        %2110 = vmatprep.subr.mxu0 0.0
        %2111 = vmatpush1.xpose.msra.mxu0 %v366
        %2112 = vmatprep.subr.mxu0 0.0
        %2113 = vmatpush1.xpose.msra.mxu0 %v365
        %2114 = vmatprep.subr.mxu0 0.0
        %2115 = vmatpush1.xpose.msra.mxu0 %v364
        %2116 = vmatprep.subr.mxu0 0.0
        %2117 = vmatpush1.xpose.msra.mxu0 %v363
        %2118 = vmatprep.subr.mxu0 0.0
        %2119 = vmatpush1.xpose.msra.mxu0 %v362
        %2120 = vmatprep.subr.mxu0 0.0
        %2121 = vmatpush1.xpose.msra.mxu0 %v361
        %2122 = vmatprep.subr.mxu0 0.0
        %2123 = vmatpush1.xpose.msra.mxu0 %v360
        %2124 = vmatprep.subr.mxu0 0.0
        %2125 = vmatpush1.xpose.msra.mxu0 %v359
        %2126 = vmatprep.subr.mxu0 0.0
        %2127 = vmatpush1.xpose.msra.mxu0 %v358
        %2128 = vmatprep.subr.mxu0 0.0
        %2129 = vmatpush1.xpose.msra.mxu0 %v357
        %2130 = vmatprep.subr.mxu0 0.0
        %2131 = vmatpush1.xpose.msra.mxu0 %v356
        %2132 = vmatprep.subr.mxu0 0.0
        %2133 = vmatpush1.xpose.msra.mxu0 %v355
        %2134 = vmatprep.subr.mxu0 0.0
        %2135 = vmatpush1.xpose.msra.mxu0 %v354
        %2136 = vmatprep.subr.mxu0 0.0
        %2137 = vmatpush2.xpose.msra.mxu0 %v385
        %2138 = vmatprep.subr.mxu0 0.0
        %2139 = vmatpush2.xpose.msra.mxu0 %v384
        %2140 = vmatprep.subr.mxu0 0.0
        %2141 = vmatpush2.xpose.msra.mxu0 %v383
        %2142 = vmatprep.subr.mxu0 0.0
        %2143 = vmatpush2.xpose.msra.mxu0 %v382
        %2144 = vmatprep.subr.mxu0 0.0
        %2145 = vmatpush2.xpose.msra.mxu0 %v381
        %2146 = vmatprep.subr.mxu0 0.0
        %2147 = vmatpush2.xpose.msra.mxu0 %v380
        %2148 = vmatprep.subr.mxu0 0.0
        %2149 = vmatpush2.xpose.msra.mxu0 %v379
        %2150 = vmatprep.subr.mxu0 0.0
        %2151 = vmatpush2.xpose.msra.mxu0 %v378
        %2152 = vmatprep.subr.mxu0 0.0
        %2153 = vmatpush2.xpose.msra.mxu0 %v377
        %2154 = vmatprep.subr.mxu0 0.0
        %2155 = vmatpush2.xpose.msra.mxu0 %v376
        %2156 = vmatprep.subr.mxu0 0.0
        %2157 = vmatpush2.xpose.msra.mxu0 %v375
        %2158 = vmatprep.subr.mxu0 0.0
        %2159 = vmatpush2.xpose.msra.mxu0 %v374
        %2160 = vmatprep.subr.mxu0 0.0
        %2161 = vmatpush2.xpose.msra.mxu0 %v373
        %2162 = vmatprep.subr.mxu0 0.0
        %2163 = vmatpush2.xpose.msra.mxu0 %v372
        %2164 = vmatprep.subr.mxu0 0.0
        %2165 = vmatpush2.xpose.msra.mxu0 %v371
        %2166 = vmatprep.subr.mxu0 0.0
        %2167 = vmatpush2.xpose.msra.mxu0 %v370
        %2168 = vmatprep.mubr.f32.mxu0 0.0
        %2169 = vmatmul.mubr.f32.gmra.mxu0 %v2103
        %v2170 = vpop.f32.mrf.mxu0
        %v2171 = vadd.f32 0.0, %v2170
        %v2172 = vpop.f32.mrf.mxu0
        %v2173 = vadd.f32 0.0, %v2172
        %2174 = vdwg.mxu0
        %2175 = vmatprep.subr.mxu0 0.0
        %2176 = vmatpush1.xpose.msra.mxu0 %v401
        %2177 = vmatprep.subr.mxu0 0.0
        %2178 = vmatpush1.xpose.msra.mxu0 %v400
        %2179 = vmatprep.subr.mxu0 0.0
        %2180 = vmatpush1.xpose.msra.mxu0 %v399
        %2181 = vmatprep.subr.mxu0 0.0
        %2182 = vmatpush1.xpose.msra.mxu0 %v398
        %2183 = vmatprep.subr.mxu0 0.0
        %2184 = vmatpush1.xpose.msra.mxu0 %v397
        %2185 = vmatprep.subr.mxu0 0.0
        %2186 = vmatpush1.xpose.msra.mxu0 %v396
        %2187 = vmatprep.subr.mxu0 0.0
        %2188 = vmatpush1.xpose.msra.mxu0 %v395
        %2189 = vmatprep.subr.mxu0 0.0
        %2190 = vmatpush1.xpose.msra.mxu0 %v394
        %2191 = vmatprep.subr.mxu0 0.0
        %2192 = vmatpush1.xpose.msra.mxu0 %v393
        %2193 = vmatprep.subr.mxu0 0.0
        %2194 = vmatpush1.xpose.msra.mxu0 %v392
        %2195 = vmatprep.subr.mxu0 0.0
        %2196 = vmatpush1.xpose.msra.mxu0 %v391
        %2197 = vmatprep.subr.mxu0 0.0
        %2198 = vmatpush1.xpose.msra.mxu0 %v390
        %2199 = vmatprep.subr.mxu0 0.0
        %2200 = vmatpush1.xpose.msra.mxu0 %v389
        %2201 = vmatprep.subr.mxu0 0.0
        %2202 = vmatpush1.xpose.msra.mxu0 %v388
        %2203 = vmatprep.subr.mxu0 0.0
        %2204 = vmatpush1.xpose.msra.mxu0 %v387
        %2205 = vmatprep.subr.mxu0 0.0
        %2206 = vmatpush1.xpose.msra.mxu0 %v386
        %2207 = vmatprep.subr.mxu0 0.0
        %2208 = vmatpush2.xpose.msra.mxu0 %v417
        %2209 = vmatprep.subr.mxu0 0.0
        %2210 = vmatpush2.xpose.msra.mxu0 %v416
        %2211 = vmatprep.subr.mxu0 0.0
        %2212 = vmatpush2.xpose.msra.mxu0 %v415
        %2213 = vmatprep.subr.mxu0 0.0
        %2214 = vmatpush2.xpose.msra.mxu0 %v414
        %2215 = vmatprep.subr.mxu0 0.0
        %2216 = vmatpush2.xpose.msra.mxu0 %v413
        %2217 = vmatprep.subr.mxu0 0.0
        %2218 = vmatpush2.xpose.msra.mxu0 %v412
        %2219 = vmatprep.subr.mxu0 0.0
        %2220 = vmatpush2.xpose.msra.mxu0 %v411
        %2221 = vmatprep.subr.mxu0 0.0
        %2222 = vmatpush2.xpose.msra.mxu0 %v410
        %2223 = vmatprep.subr.mxu0 0.0
        %2224 = vmatpush2.xpose.msra.mxu0 %v409
        %2225 = vmatprep.subr.mxu0 0.0
        %2226 = vmatpush2.xpose.msra.mxu0 %v408
        %2227 = vmatprep.subr.mxu0 0.0
        %2228 = vmatpush2.xpose.msra.mxu0 %v407
        %2229 = vmatprep.subr.mxu0 0.0
        %2230 = vmatpush2.xpose.msra.mxu0 %v406
        %2231 = vmatprep.subr.mxu0 0.0
        %2232 = vmatpush2.xpose.msra.mxu0 %v405
        %2233 = vmatprep.subr.mxu0 0.0
        %2234 = vmatpush2.xpose.msra.mxu0 %v404
        %2235 = vmatprep.subr.mxu0 0.0
        %2236 = vmatpush2.xpose.msra.mxu0 %v403
        %2237 = vmatprep.subr.mxu0 0.0
        %2238 = vmatpush2.xpose.msra.mxu0 %v402
        %2239 = vmatprep.mubr.f32.mxu0 0.0
        %2240 = vmatmul.mubr.f32.gmra.mxu0 %v2103
        %v2241 = vpop.f32.mrf.mxu0
        %v2242 = vadd.f32 0.0, %v2241
        %v2243 = vpop.f32.mrf.mxu0
        %v2244 = vadd.f32 0.0, %v2243
        %2245 = vdwg.mxu0
        %v2246 = vadd.f32 %v2171, %v616
        %v2247 = vadd.f32 %v2173, %v616
        %v2248 = vadd.f32 %v2242, %v616
        %v2249 = vadd.f32 %v2244, %v616
        %v2250 = vxor.u32 %v2246, 2147483648
        %v2251 = vxor.u32 %v2247, 2147483648
        %v2252 = vxor.u32 %v2248, 2147483648
        %v2253 = vxor.u32 %v2249, 2147483648
        %v2254 = vmul.f32 %v2250, 1.442695
        %v2255 = vpow.pop %v2254
        %v2256 = vmul.f32 %v2251, 1.442695
        %v2257 = vpow.pop %v2256
        %v2258 = vmul.f32 %v2252, 1.442695
        %v2259 = vpow.pop %v2258
        %v2260 = vmul.f32 %v2253, 1.442695
        %v2261 = vpow.pop %v2260
        %v2262 = vadd.f32 %v2255, 1.0
        %v2263 = vadd.f32 %v2257, 1.0
        %v2264 = vadd.f32 %v2259, 1.0
        %v2265 = vadd.f32 %v2261, 1.0
        %v2266 = vrcp.pop %v2262
        %v2267 = vmul.f32 1.0, %v2266
        %v2268 = vrcp.pop %v2263
        %v2269 = vmul.f32 1.0, %v2268
        %v2270 = vrcp.pop %v2264
        %v2271 = vmul.f32 1.0, %v2270
        %v2272 = vrcp.pop %v2265
        %v2273 = vmul.f32 1.0, %v2272
        %v2278 = vrot.slane %v1972, 1
        %v2279 = vrot.slane %v1974, 1
        %v2280 = vrot.slane %v2055, 1
        %v2281 = vrot.slane %v2057, 1
        %v2286 = vmax.f32 %v1972, %v2278
        %v2287 = vmax.f32 %v1974, %v2279
        %v2288 = vmax.f32 %v2055, %v2280
        %v2289 = vmax.f32 %v2057, %v2281
        %v2290 = vrot.slane %v1972, 7
        %v2291 = vrot.slane %v1974, 7
        %v2292 = vrot.slane %v2055, 7
        %v2293 = vrot.slane %v2057, 7
        %vm2298 = vcmp.gt.f32.partialorder %v1972, %v2290
        %vm2299 = vcmp.gt.f32.partialorder %v1974, %v2291
        %vm2300 = vcmp.gt.f32.partialorder %v2055, %v2292
        %vm2301 = vcmp.gt.f32.partialorder %v2057, %v2293
        %v2302 = vsel %vm2298, 1.0, 0.0
        %v2303 = vsel %vm2299, 1.0, 0.0
        %v2304 = vsel %vm2300, 1.0, 0.0
        %v2305 = vsel %vm2301, 1.0, 0.0
        %v2310 = vrot.slane %v2286, 6
        %v2311 = vrot.slane %v2287, 6
        %v2312 = vrot.slane %v2288, 6
        %v2313 = vrot.slane %v2289, 6
        %vm2318 = vcmp.gt.f32.partialorder %v1972, %v2310
        %vm2319 = vcmp.gt.f32.partialorder %v1974, %v2311
        %vm2320 = vcmp.gt.f32.partialorder %v2055, %v2312
        %vm2321 = vcmp.gt.f32.partialorder %v2057, %v2313
        %v2326 = vrot.slane %v2302, 7
        %v2327 = vrot.slane %v2303, 7
        %v2328 = vrot.slane %v2304, 7
        %v2329 = vrot.slane %v2305, 7
        %v2334 = vsel %vm2318, 2.0, %v2326
        %v2335 = vsel %vm2319, 2.0, %v2327
        %v2336 = vsel %vm2320, 2.0, %v2328
        %v2337 = vsel %vm2321, 2.0, %v2329
        %v2338 = vlaneseq
        %v2339 = vshrl.u32 %v2338, 7
        %vm2340 = vcmp.eq.s32.totalorder %v2339, 0
        %v2341 = vlaneseq
        %v2342 = vshrl.u32 %v2341, 7
        %v2343 = vsub.s32 0, %v2342
        %v2344 = vrot.slane %v2267, %v2343
        %v2345 = vlaneseq
        %v2346 = vshrl.u32 %v2345, 7
        %v2347 = vsub.s32 0, %v2346
        %v2348 = vrot.slane %v2269, %v2347
        %v2349 = vlaneseq
        %v2350 = vshrl.u32 %v2349, 7
        %v2351 = vsub.s32 0, %v2350
        %v2352 = vrot.slane %v2271, %v2351
        %v2353 = vlaneseq
        %v2354 = vshrl.u32 %v2353, 7
        %v2355 = vsub.s32 0, %v2354
        %v2356 = vrot.slane %v2273, %v2355
        %v2357 = vsel %vm2340, %v2344, 0.0
        %v2358 = vsel %vm2340, %v2348, 0.0
        %v2359 = vsel %vm2340, %v2352, 0.0
        %v2360 = vsel %vm2340, %v2356, 0.0
        %vm2361 = vcmp.eq.s32.totalorder %v2339, 1
        %v2362 = vlaneseq
        %v2363 = vshrl.u32 %v2362, 7
        %v2364 = vsub.s32 2, %v2363
        %v2365 = vrot.slane %v2334, %v2364
        %v2366 = vlaneseq
        %v2367 = vshrl.u32 %v2366, 7
        %v2368 = vsub.s32 2, %v2367
        %v2369 = vrot.slane %v2335, %v2368
        %v2370 = vlaneseq
        %v2371 = vshrl.u32 %v2370, 7
        %v2372 = vsub.s32 2, %v2371
        %v2373 = vrot.slane %v2336, %v2372
        %v2374 = vlaneseq
        %v2375 = vshrl.u32 %v2374, 7
        %v2376 = vsub.s32 2, %v2375
        %v2377 = vrot.slane %v2337, %v2376
        %v2378 = vsel %vm2361, %v2365, %v2357
        %v2379 = vsel %vm2361, %v2369, %v2358
        %v2380 = vsel %vm2361, %v2373, %v2359
        %v2381 = vsel %vm2361, %v2377, %v2360
        %vm2382 = vcmp.eq.s32.totalorder %v2339, 2
        %v2383 = vlaneseq
        %v2384 = vshrl.u32 %v2383, 7
        %v2385 = vsub.s32 0, %v2384
        %v2386 = vrot.slane %v1972, %v2385
        %v2387 = vlaneseq
        %v2388 = vshrl.u32 %v2387, 7
        %v2389 = vsub.s32 0, %v2388
        %v2390 = vrot.slane %v1974, %v2389
        %v2391 = vlaneseq
        %v2392 = vshrl.u32 %v2391, 7
        %v2393 = vsub.s32 0, %v2392
        %v2394 = vrot.slane %v2055, %v2393
        %v2395 = vlaneseq
        %v2396 = vshrl.u32 %v2395, 7
        %v2397 = vsub.s32 0, %v2396
        %v2398 = vrot.slane %v2057, %v2397
        %v2399 = vsel %vm2382, %v2386, %v2378
        %v2400 = vsel %vm2382, %v2390, %v2379
        %v2401 = vsel %vm2382, %v2394, %v2380
        %v2402 = vsel %vm2382, %v2398, %v2381
        %vm2403 = vcmp.eq.s32.totalorder %v2339, 3
        %v2404 = vlaneseq
        %v2405 = vshrl.u32 %v2404, 7
        %v2406 = vsub.s32 1, %v2405
        %v2407 = vrot.slane %v1972, %v2406
        %v2408 = vlaneseq
        %v2409 = vshrl.u32 %v2408, 7
        %v2410 = vsub.s32 1, %v2409
        %v2411 = vrot.slane %v1974, %v2410
        %v2412 = vlaneseq
        %v2413 = vshrl.u32 %v2412, 7
        %v2414 = vsub.s32 1, %v2413
        %v2415 = vrot.slane %v2055, %v2414
        %v2416 = vlaneseq
        %v2417 = vshrl.u32 %v2416, 7
        %v2418 = vsub.s32 1, %v2417
        %v2419 = vrot.slane %v2057, %v2418
        %v2420 = vsel %vm2403, %v2407, %v2399
        %v2421 = vsel %vm2403, %v2411, %v2400
        %v2422 = vsel %vm2403, %v2415, %v2401
        %v2423 = vsel %vm2403, %v2419, %v2402
        %vm2424 = vcmp.eq.s32.totalorder %v2339, 4
        %v2425 = vlaneseq
        %v2426 = vshrl.u32 %v2425, 7
        %v2427 = vsub.s32 2, %v2426
        %v2428 = vrot.slane %v1972, %v2427
        %v2429 = vlaneseq
        %v2430 = vshrl.u32 %v2429, 7
        %v2431 = vsub.s32 2, %v2430
        %v2432 = vrot.slane %v1974, %v2431
        %v2433 = vlaneseq
        %v2434 = vshrl.u32 %v2433, 7
        %v2435 = vsub.s32 2, %v2434
        %v2436 = vrot.slane %v2055, %v2435
        %v2437 = vlaneseq
        %v2438 = vshrl.u32 %v2437, 7
        %v2439 = vsub.s32 2, %v2438
        %v2440 = vrot.slane %v2057, %v2439
        %v2441 = vsel %vm2424, %v2428, %v2420
        %v2442 = vsel %vm2424, %v2432, %v2421
        %v2443 = vsel %vm2424, %v2436, %v2422
        %v2444 = vsel %vm2424, %v2440, %v2423
        %2445 = vst [vmem:[%s350] sm:$0xff] %v2441
        %2446 = vst [vmem:[%s350 + $0x8] sm:$0xff] %v2442
        %2447 = vst [vmem:[%s350 + $0x10] sm:$0xff] %v2443
        %2448 = vst [vmem:[%s350 + $0x18] sm:$0xff] %v2444
        %s2449 = sand.u32 %s170, 1
        %s2450 = scalar_lea.sflag [#allocation5], %s2449
        %s2451 = sand.u32 %s170, 1
        %s2452 = smul.addr %s2451, 512
        %s2453 = scalar_lea.vmem [#allocation11], %s2452
        %s2454 = sand.u32 %s196, 1
        %s2455 = scalar_lea.sflag [#allocation13], %s2454
        %s2456 = sand.u32 %s196, 1
        %s2457 = smul.addr %s2456, 32
        %s2458 = scalar_lea.vmem [#allocation12], %s2457
        // Predicated region
        $region61: #{tpu_custom_call.1} parent=43 // pred_check
          %p2459 = pneg %p180
        $region62: #{tpu_custom_call.1} parent=43 // pred_check_branch
          %2461 = sbr.rel (%p2459) target = $region64
        $region63: #{tpu_custom_call.1} parent=43 // pred_region
          %s2462 = smul.u32 64, %s31
          %s2464 = ssub.s32 8192, 8192
          %2465 = vsyncadd %s2450, %s2464
          %s2466 = smul.addr %s2462, 128
          %s2467 = scalar_lea.hbm %s6, %s2466
          %s2468 = sshll.u32 %s2453, 4
          %s2469 = int_to_ptr.vmem [resolvable:$true] %s2468
          %2474 = dma.vmem_to_hbm [thread:$0]  %s2469, 8192, %s2467, %s2450, 128, 128, 8
        $region64: #{tpu_custom_call.1} parent=43 // pred_fallthru
          _
        // Predicated region
        $region65: #{tpu_custom_call.1} parent=43 // pred_check
          %p2475 = pneg %p206
        $region66: #{tpu_custom_call.1} parent=43 // pred_check_branch
          %2477 = sbr.rel (%p2475) target = $region68
        $region67: #{tpu_custom_call.1} parent=43 // pred_region
          %s2479 = ssub.s32 512, 512
          %2480 = vsyncadd %s2455, %s2479
          %s2481 = smul.addr %s31, 4
          %s2482 = smul.addr %s2481, 128
          %s2483 = scalar_lea.hbm %s7, %s2482
          %s2485 = sshll.u32 %s2458, 4
          %s2486 = int_to_ptr.vmem [resolvable:$true] %s2485
          %2488 = dma.vmem_to_hbm [thread:$0]  %s2486, 512, %s2483, %s2455
        $region68: #{tpu_custom_call.1} parent=43 // pred_fallthru
          _
      $region44: #{tpu_custom_call.1} parent=5 // pred_fallthru
        _
      %p2489 = scmp.le.s32.totalorder 2, %s26
      // Predicated region
      $region69: #{tpu_custom_call.1} parent=5 // pred_check
        %p2490 = pneg %p2489
      $region70: #{tpu_custom_call.1} parent=5 // pred_check_branch
        %2492 = sbr.rel (%p2490) target = $region72
      $region71: #{tpu_custom_call.1} parent=5 // pred_region
        %s2493 = ssub.s32 %s26, 2
        // Predicated region
        $region73: #{tpu_custom_call.1} parent=71 // pred_check
          %p2494 = pneg %p186
        $region74: #{tpu_custom_call.1} parent=71 // pred_check_branch
          %2496 = sbr.rel (%p2494) target = $region76
        $region75: #{tpu_custom_call.1} parent=71 // pred_region
          %s2497 = sand.u32 %s171, 1
          %s2498 = scalar_lea.sflag [#allocation5], %s2497
          %s2499 = sand.u32 %s171, 1
          %s2500 = smul.addr %s2499, 512
          %s2501 = scalar_lea.vmem [#allocation11], %s2500
          %2502 = dma.done %s2498, 8192
        $region76: #{tpu_custom_call.1} parent=71 // pred_fallthru
          _
        // Predicated region
        $region77: #{tpu_custom_call.1} parent=71 // pred_check
          %p2503 = pneg %p212
        $region78: #{tpu_custom_call.1} parent=71 // pred_check_branch
          %2505 = sbr.rel (%p2503) target = $region80
        $region79: #{tpu_custom_call.1} parent=71 // pred_region
          %s2506 = sand.u32 %s197, 1
          %s2507 = scalar_lea.sflag [#allocation13], %s2506
          %s2508 = sand.u32 %s197, 1
          %s2509 = smul.addr %s2508, 32
          %s2510 = scalar_lea.vmem [#allocation12], %s2509
          %2511 = dma.done %s2507, 512
        $region80: #{tpu_custom_call.1} parent=71 // pred_fallthru
          _
      $region72: #{tpu_custom_call.1} parent=5 // pred_fallthru
        _
    $region6: #{tpu_custom_call.1} parent=1 // loop_footer
      %s30 = sadd.s32 1, %s26
    $region7: #{tpu_custom_call.1} parent=1 // loop_footer_branch
      %25 = sbr.rel target = $region3
    $region8: #{tpu_custom_call.1} parent=1 // loop_exit
      _
    %2512 = vsyncpa [#allocation4], 1
    %s2513 = scalar_lea.sflag [#allocation4], 1
    %2514 = vsyncpa %s2513, 1
    %2515 = vsyncpa [#allocation7], 1
    %2516 = vsyncpa [#allocation10], 1
    %2517 = vsyncpa [#allocation5], 1
    %s2518 = scalar_lea.sflag [#allocation5], 1
    %2519 = vsyncpa %s2518, 1
    %2520 = vsyncpa [#allocation13], 1
    %s2521 = scalar_lea.sflag [#allocation13], 1
    %2522 = vsyncpa %s2521, 1

</llo_original>
